<compile_context>
chip_gen: v5e
topology: v5e:2x2
jax: 0.10.0
libtpu: 0.0.40
codegen_flags: <defaults>
</compile_context>

<pallas_src>
import functools

import jax
import jax.numpy as jnp
from jax import lax
from jax.experimental import pallas as pl
from jax.experimental.pallas import tpu as pltpu


def _round_up(x, m):
    return (x + m - 1) // m * m


def nlp_lstm_kernel(x_ref, wih_ref, whh_ref, b_ref, wfc_ref, bfc_ref,
                    out_ref, xproj_ref, h_ref, c_ref, *, seq_len):
    """One time-chunk of the LSTM per grid step; h/c persist in VMEM scratch.

    x_ref     : (Tc*Bp, H)    bf16 embedded inputs for this chunk (time-major)
    wih_ref   : (H, 4*Hp)     bf16 pre-transposed, gate-padded input weights
    whh_ref   : (Hp, 4*Hp)    bf16 pre-transposed, gate-padded recurrent weights
    b_ref     : (1, 4*Hp)     f32  b_ih + b_hh, gate-padded
    wfc_ref   : (Hp, Op)      bf16 pre-transposed fc weight
    bfc_ref   : (1, Op)       f32  fc bias
    out_ref   : (Bp, Op)      f32  sigmoid(fc(h_last)), written on last chunk
    xproj_ref : (Tc*Bp, 4*Hp) f32  per-chunk hoisted input projection (scratch)
    h_ref/c_ref : (Bp, Hp)    f32  LSTM state, persists across grid steps
    """
    chunk = pl.program_id(0)
    n_chunks = pl.num_programs(0)
    Bp, Hp = h_ref.shape
    Tc = xproj_ref.shape[0] // Bp

    @pl.when(chunk == 0)
    def _():
        h_ref[...] = jnp.zeros_like(h_ref)
        c_ref[...] = jnp.zeros_like(c_ref)

    # Hoisted input-to-hidden projection for the whole chunk: one MXU matmul
    # (bf16 operands, f32 accumulate), off the serial critical path.
    xproj_ref[...] = (
        jnp.dot(x_ref[...], wih_ref[...], preferred_element_type=jnp.float32)
        + b_ref[...])

    t0 = chunk * Tc                     # global time offset of this chunk
    need_mask = (seq_len % Tc) != 0     # trace-time constant

    def step(t, carry):
        h, c = carry
        row = pl.multiple_of(t * Bp, Bp)
        # Only the recurrent matmul sits on the serial critical path.
        gates = xproj_ref[pl.ds(row, Bp), :] + jnp.dot(
            h.astype(jnp.bfloat16), whh_ref[...],
            preferred_element_type=jnp.float32)
        # PyTorch gate order i, f, g, o; each gate is a 128-lane aligned block.
        i_g = jax.nn.sigmoid(gates[:, 0 * Hp:1 * Hp])
        f_g = jax.nn.sigmoid(gates[:, 1 * Hp:2 * Hp])
        g_g = jnp.tanh(gates[:, 2 * Hp:3 * Hp])
        o_g = jax.nn.sigmoid(gates[:, 3 * Hp:4 * Hp])
        c_new = f_g * c + i_g * g_g
        h_new = o_g * jnp.tanh(c_new)
        if need_mask:  # skip state update on padded time steps (last chunk)
            valid = (t0 + t) < seq_len
            h_new = jnp.where(valid, h_new, h)
            c_new = jnp.where(valid, c_new, c)
        return h_new, c_new

    unroll = True if Tc <= 8 else 8
    h_last, c_last = lax.fori_loop(0, Tc, step, (h_ref[...], c_ref[...]),
                                   unroll=unroll)
    h_ref[...] = h_last
    c_ref[...] = c_last

    @pl.when(chunk == n_chunks - 1)
    def _():
        # Final Linear + sigmoid; lane-dense (Bp, Op) output store.
        logits = (jnp.dot(h_last.astype(jnp.bfloat16), wfc_ref[...],
                          preferred_element_type=jnp.float32) + bfc_ref[...])
        out_ref[...] = jax.nn.sigmoid(logits)


def _pack_padded_weights(params, Hp, Op):
    """Pre-transpose + zero-pad weights so each gate is a full 128-lane block.

    Matmul operands are returned in bf16 (MXU-native); biases stay f32 since
    they only feed f32 accumulators / elementwise math.
    """
    w_ih = params["w_ih"].astype(jnp.float32)   # (4H, H), gates [i; f; g; o]
    w_hh = params["w_hh"].astype(jnp.float32)   # (4H, H)
    b = (params["b_ih"] + params["b_hh"]).astype(jnp.float32)   # (4H,)
    w_fc = params["w_fc"].astype(jnp.float32)   # (O, H)
    b_fc = params["b_fc"].astype(jnp.float32)   # (O,)
    H = w_ih.shape[1]
    O = w_fc.shape[0]

    def gate_weight_t(w, rows):                 # (4H, H) -> (rows, 4*Hp)
        out = jnp.zeros((rows, 4 * Hp), jnp.float32)
        for k in range(4):
            blk = w[k * H:(k + 1) * H, :].T     # (H_in, H_out)
            out = out.at[:H, k * Hp:k * Hp + H].set(blk)
        return out

    def gate_bias(bv):                          # (4H,) -> (1, 4*Hp)
        out = jnp.zeros((1, 4 * Hp), jnp.float32)
        for k in range(4):
            out = out.at[0, k * Hp:k * Hp + H].set(bv[k * H:(k + 1) * H])
        return out

    w_ih_t = gate_weight_t(w_ih, H).astype(jnp.bfloat16)     # (H, 4Hp)
    w_hh_t = gate_weight_t(w_hh, Hp).astype(jnp.bfloat16)    # (Hp, 4Hp)
    bias = gate_bias(b)                                       # (1, 4Hp) f32
    w_fc_t = (jnp.zeros((Hp, Op), jnp.float32).at[:H, :O]
              .set(w_fc.T)).astype(jnp.bfloat16)              # (Hp, Op)
    bias_fc = jnp.zeros((1, Op), jnp.float32).at[0, :O].set(b_fc)
    return w_ih_t, w_hh_t, bias, w_fc_t, bias_fc


def nlpnet_forward(tokens, params, time_chunk=None):
    """tokens: (batch, seq) int32.  Returns (batch, output_size) float32."""
    H = params["w_hh"].shape[1]
    O = params["w_fc"].shape[0]
    B, S = tokens.shape

    Hp = _round_up(max(H, 1), 128)   # lane-aligned hidden (each gate = Hp lanes)
    Bp = _round_up(max(B, 1), 8)     # sublane-aligned batch
    Op = _round_up(max(O, 1), 128)   # lane-dense output store

    # Time-chunk size: bound the per-chunk xproj scratch to ~2 MiB so large S
    # never exceeds the scoped-VMEM / v7x 64 MiB ceilings.
    if time_chunk is None:
        xproj_row_bytes = Bp * 4 * Hp * 4
        time_chunk = max(1, min(64, (2 * 2**20) // xproj_row_bytes))
    Tc = int(min(time_chunk, S))
    S_pad = _round_up(S, Tc)
    n_chunks = S_pad // Tc

    # Glue matching torch forward: transpose to time-major + embedding lookup.
    # TODO(synk): torch nn.Embedding errors on out-of-range ids; jnp.take clamps.
    x = tokens.T                                                  # (S, B)
    embed = params["embed"].astype(jnp.float32)                   # (V, H)
    x_emb = jnp.take(embed, x, axis=0)                            # (S, B, H)
    x_emb = jnp.pad(x_emb, ((0, S_pad - S), (0, Bp - B), (0, 0)))  # (S_pad,Bp,H)
    x_flat = x_emb.reshape(S_pad * Bp, H).astype(jnp.bfloat16)

    w_ih_t, w_hh_t, bias, w_fc_t, bias_fc = _pack_padded_weights(params, Hp, Op)

    # Scoped-VMEM budget: per-chunk footprint (inputs double-buffered) + 4x
    # headroom, floored at 16 MiB and capped under the v7x 64 MiB physical VMEM.
    bytes_in = 2 * (Tc * Bp * H * 2)                      # x chunk, 2 buffers
    bytes_w = 2 * ((H + Hp) * 4 * Hp * 2 + Hp * Op * 2 + (4 * Hp + Op) * 4)
    bytes_scratch = Tc * Bp * 4 * Hp * 4 + 2 * Bp * Hp * 4
    bytes_out = 2 * Bp * Op * 4
    vmem_needed = bytes_in + bytes_w + bytes_scratch + bytes_out
    vmem_limit = int(min(max(4 * vmem_needed, 16 * 2**20), 48 * 2**20))

    flops = (2 * S_pad * Bp * H * 4 * Hp        # hoisted input projection
             + 2 * S_pad * Bp * Hp * 4 * Hp     # recurrent matmuls
             + 2 * Bp * Hp * Op                 # fc
             + 10 * S_pad * Bp * Hp)            # gate elementwise
    cost = pl.CostEstimate(
        flops=int(flops),
        transcendentals=int(4 * S_pad * Bp * Hp + Bp * Op),
        bytes_accessed=int(x_flat.size * 2 + vmem_needed + Bp * Op * 4))

    kernel = functools.partial(nlp_lstm_kernel, seq_len=S)

    out_padded = pl.pallas_call(
        kernel,
        out_shape=jax.ShapeDtypeStruct((Bp, Op), jnp.float32),
        grid_spec=pltpu.PrefetchScalarGridSpec(
            num_scalar_prefetch=0,
            grid=(n_chunks,),
            in_specs=[
                pl.BlockSpec((Tc * Bp, H), lambda c: (c, 0)),     # x chunk
                pl.BlockSpec((H, 4 * Hp), lambda c: (0, 0)),      # W_ih^T
                pl.BlockSpec((Hp, 4 * Hp), lambda c: (0, 0)),     # W_hh^T
                pl.BlockSpec((1, 4 * Hp), lambda c: (0, 0)),      # lstm bias
                pl.BlockSpec((Hp, Op), lambda c: (0, 0)),         # W_fc^T
                pl.BlockSpec((1, Op), lambda c: (0, 0)),          # fc bias
            ],
            out_specs=pl.BlockSpec((Bp, Op), lambda c: (0, 0)),
            scratch_shapes=[
                pltpu.VMEM((Tc * Bp, 4 * Hp), jnp.float32),       # xproj chunk
                pltpu.VMEM((Bp, Hp), jnp.float32),                # h state
                pltpu.VMEM((Bp, Hp), jnp.float32),                # c state
            ],
        ),
        compiler_params=pltpu.CompilerParams(
            dimension_semantics=("arbitrary",),
            vmem_limit_bytes=vmem_limit),
        cost_estimate=cost,
    )(x_flat, w_ih_t, w_hh_t, bias, w_fc_t, bias_fc)

    return out_padded[:B, :O]


def nlpnet_reference(tokens, params):
    """Pure-JAX f32 reference matching torch NLPNet.forward (zero init state)."""
    H = params["w_hh"].shape[1]
    x = tokens.T                                                   # (S, B)
    emb = jnp.take(params["embed"].astype(jnp.float32), x, axis=0)  # (S, B, H)
    w_ih, w_hh = params["w_ih"], params["w_hh"]
    b = params["b_ih"] + params["b_hh"]

    def step(carry, xt):
        h, c = carry
        gates = xt @ w_ih.T + h @ w_hh.T + b
        i, f, g, o = jnp.split(gates, 4, axis=-1)
        c = jax.nn.sigmoid(f) * c + jax.nn.sigmoid(i) * jnp.tanh(g)
        h = jax.nn.sigmoid(o) * jnp.tanh(c)
        return (h, c), None

    B = tokens.shape[0]
    init = (jnp.zeros((B, H), jnp.float32), jnp.zeros((B, H), jnp.float32))
    (h_last, _), _ = lax.scan(step, init, emb)
    return jax.nn.sigmoid(h_last @ params["w_fc"].T + params["b_fc"])


def init_params(key, vocab_size, hidden_size, output_size):
    """Parameters in PyTorch layout (Embedding / LSTM / Linear)."""
    ks = jax.random.split(key, 7)
    H, O = hidden_size, output_size
    scale = 0.1
    return {
        "embed": scale * jax.random.normal(ks[0], (vocab_size, H), jnp.float32),
        "w_ih":  scale * jax.random.normal(ks[1], (4 * H, H), jnp.float32),
        "w_hh":  scale * jax.random.normal(ks[2], (4 * H, H), jnp.float32),
        "b_ih":  scale * jax.random.normal(ks[3], (4 * H,), jnp.float32),
        "b_hh":  scale * jax.random.normal(ks[4], (4 * H,), jnp.float32),
        "w_fc":  scale * jax.random.normal(ks[5], (O, H), jnp.float32),
        "b_fc":  scale * jax.random.normal(ks[6], (O,), jnp.float32),
    }


if __name__ == "__main__":
    vocab_size = 50
    batch_size = 2
    hidden_size = 32
    output_size = 4
    seq_len = 8

    key = jax.random.PRNGKey(0)
    k_tok, k_par = jax.random.split(key)

    tokens = jax.random.randint(k_tok, (batch_size, seq_len), 0, vocab_size,
                                dtype=jnp.int32)
    params = init_params(k_par, vocab_size, hidden_size, output_size)

    fwd = jax.jit(nlpnet_forward, static_argnames=("time_chunk",))
    # time_chunk=4 -> 2 grid steps: exercises the time-chunked recurrence with
    # h/c carried in VMEM scratch across grid iterations.
    out = fwd(tokens, params, time_chunk=4)
    jax.block_until_ready(out)

    ref = nlpnet_reference(tokens, params)
    assert out.shape == (batch_size, output_size)
    assert bool(jnp.all(jnp.isfinite(out)))
    # bf16 matmul operands with f32 accumulation -> small drift vs the f32 ref.
    max_err = float(jnp.max(jnp.abs(out - ref)))
    assert max_err < 5e-2, f"max abs error vs reference: {max_err}"
    print("KERNEL_OK")
</pallas_src>

<mosaic_0001>
module attributes {stable_mosaic.version = 11 : i64} {
  func.func @nlp_lstm_kernel(%arg0: i32, %arg1: memref<32x32xbf16, #tpu.memory_space<vmem>>, %arg2: memref<32x512xbf16, #tpu.memory_space<vmem>>, %arg3: memref<128x512xbf16, #tpu.memory_space<vmem>>, %arg4: memref<1x512xf32, #tpu.memory_space<vmem>>, %arg5: memref<128x128xbf16, #tpu.memory_space<vmem>>, %arg6: memref<1x128xf32, #tpu.memory_space<vmem>>, %arg7: memref<8x128xf32, #tpu.memory_space<vmem>>, %arg8: memref<32x512xf32, #tpu.memory_space<vmem>>, %arg9: memref<8x128xf32, #tpu.memory_space<vmem>>, %arg10: memref<8x128xf32, #tpu.memory_space<vmem>>) attributes {dimension_semantics = [#tpu.dimension_semantics<arbitrary>], iteration_bounds = array<i64: 2>, scalar_prefetch = 0 : i64, scratch_operands = 3 : i64, tpu.core_type = #tpu.core_type<tc>, window_params = [{transform_indices = @transform_0, window_bounds = array<i64: 32, 32>}, {pipeline_mode = #tpu.pipeline_mode<synchronous>, transform_indices = @transform_1, window_bounds = array<i64: 32, 512>}, {pipeline_mode = #tpu.pipeline_mode<synchronous>, transform_indices = @transform_2, window_bounds = array<i64: 128, 512>}, {pipeline_mode = #tpu.pipeline_mode<synchronous>, transform_indices = @transform_3, window_bounds = array<i64: 1, 512>}, {pipeline_mode = #tpu.pipeline_mode<synchronous>, transform_indices = @transform_4, window_bounds = array<i64: 128, 128>}, {pipeline_mode = #tpu.pipeline_mode<synchronous>, transform_indices = @transform_5, window_bounds = array<i64: 1, 128>}, {pipeline_mode = #tpu.pipeline_mode<synchronous>, transform_indices = @transform_6, window_bounds = array<i64: 8, 128>}]} {
    %c0_i32 = arith.constant 0 : i32
    %0 = arith.cmpi eq, %arg0, %c0_i32 : i32
    %1 = arith.extui %0 : i1 to i32
    %c0_i32_0 = arith.constant 0 : i32
    %2 = arith.cmpi ne, %1, %c0_i32_0 : i32
    scf.if %2 {
      %cst_50 = arith.constant 0.000000e+00 : f32
      %149 = vector.broadcast %cst_50 : f32 to vector<8x128xf32>
      %c0_51 = arith.constant 0 : index
      %c0_52 = arith.constant 0 : index
      %150 = vector.load %arg9[%c0_51, %c0_52] : memref<8x128xf32, #tpu.memory_space<vmem>>, vector<8x128xf32>
      tpu.vector_store %arg9[%c0_51, %c0_52], %149 {strides = array<i32>} : memref<8x128xf32, #tpu.memory_space<vmem>>, vector<8x128xf32>,
      %cst_53 = arith.constant 0.000000e+00 : f32
      %151 = vector.broadcast %cst_53 : f32 to vector<8x128xf32>
      %c0_54 = arith.constant 0 : index
      %c0_55 = arith.constant 0 : index
      %152 = vector.load %arg10[%c0_54, %c0_55] : memref<8x128xf32, #tpu.memory_space<vmem>>, vector<8x128xf32>
      tpu.vector_store %arg10[%c0_54, %c0_55], %151 {strides = array<i32>} : memref<8x128xf32, #tpu.memory_space<vmem>>, vector<8x128xf32>,
    } else {
    }
    %c0 = arith.constant 0 : index
    %c0_1 = arith.constant 0 : index
    %3 = vector.load %arg1[%c0, %c0_1] : memref<32x32xbf16, #tpu.memory_space<vmem>>, vector<32x32xbf16>
    %c0_2 = arith.constant 0 : index
    %c0_3 = arith.constant 0 : index
    %4 = vector.load %arg2[%c0_2, %c0_3] : memref<32x512xbf16, #tpu.memory_space<vmem>>, vector<32x512xbf16>
    %cst = arith.constant dense<0.000000e+00> : vector<32x512xf32>
    %5 = tpu.matmul %3, %4, %cst {dimension_numbers = #tpu.dot_dimension_numbers<[1], [0], [0], [1], [0, 0, 1, 1], [], []>} : vector<32x32xbf16>, vector<32x512xbf16>, vector<32x512xf32> -> vector<32x512xf32>
    %c0_4 = arith.constant 0 : index
    %c0_5 = arith.constant 0 : index
    %6 = vector.load %arg4[%c0_4, %c0_5] : memref<1x512xf32, #tpu.memory_space<vmem>>, vector<1x512xf32>
    %7 = vector.broadcast %6 : vector<1x512xf32> to vector<32x512xf32>
    %8 = arith.addf %5, %7 : vector<32x512xf32>
    %c0_6 = arith.constant 0 : index
    %c0_7 = arith.constant 0 : index
    %9 = vector.load %arg8[%c0_6, %c0_7] : memref<32x512xf32, #tpu.memory_space<vmem>>, vector<32x512xf32>
    tpu.vector_store %arg8[%c0_6, %c0_7], %8 {strides = array<i32>} : memref<32x512xf32, #tpu.memory_space<vmem>>, vector<32x512xf32>,
    %c0_8 = arith.constant 0 : index
    %c0_9 = arith.constant 0 : index
    %10 = vector.load %arg9[%c0_8, %c0_9] : memref<8x128xf32, #tpu.memory_space<vmem>>, vector<8x128xf32>
    %c0_10 = arith.constant 0 : index
    %c0_11 = arith.constant 0 : index
    %11 = vector.load %arg10[%c0_10, %c0_11] : memref<8x128xf32, #tpu.memory_space<vmem>>, vector<8x128xf32>
    %c0_i32_12 = arith.constant 0 : i32
    %c8_i32 = arith.constant 8 : i32
    %12 = arith.muli %c0_i32_12, %c8_i32 : i32
    %13 = tpu.assume_multiple %12, 8 : i32
    %14 = arith.index_cast %13 : i32 to index
    %c0_13 = arith.constant 0 : index
    %15 = vector.load %arg8[%14, %c0_13] : memref<32x512xf32, #tpu.memory_space<vmem>>, vector<8x512xf32>
    %16 = arith.truncf %10 : vector<8x128xf32> to vector<8x128xbf16>
    %c0_14 = arith.constant 0 : index
    %c0_15 = arith.constant 0 : index
    %17 = vector.load %arg3[%c0_14, %c0_15] : memref<128x512xbf16, #tpu.memory_space<vmem>>, vector<128x512xbf16>
    %cst_16 = arith.constant dense<0.000000e+00> : vector<8x512xf32>
    %18 = tpu.matmul %16, %17, %cst_16 {dimension_numbers = #tpu.dot_dimension_numbers<[1], [0], [0], [1], [0, 0, 1, 1], [], []>} : vector<8x128xbf16>, vector<128x512xbf16>, vector<8x512xf32> -> vector<8x512xf32>
    %19 = arith.addf %15, %18 : vector<8x512xf32>
    %20 = vector.extract_strided_slice %19 {offsets = [0, 0], sizes = [8, 128], strides = [1, 1]} : vector<8x512xf32> to vector<8x128xf32>
    %21 = arith.negf %20 : vector<8x128xf32>
    %22 = math.exp %21 : vector<8x128xf32>
    %cst_17 = arith.constant 1.000000e+00 : f32
    %23 = vector.broadcast %cst_17 : f32 to vector<8x128xf32>
    %24 = arith.addf %23, %22 : vector<8x128xf32>
    %25 = arith.divf %23, %24 : vector<8x128xf32>
    %26 = vector.extract_strided_slice %19 {offsets = [0, 128], sizes = [8, 128], strides = [1, 1]} : vector<8x512xf32> to vector<8x128xf32>
    %27 = arith.negf %26 : vector<8x128xf32>
    %28 = math.exp %27 : vector<8x128xf32>
    %cst_18 = arith.constant 1.000000e+00 : f32
    %29 = vector.broadcast %cst_18 : f32 to vector<8x128xf32>
    %30 = arith.addf %29, %28 : vector<8x128xf32>
    %31 = arith.divf %29, %30 : vector<8x128xf32>
    %32 = vector.extract_strided_slice %19 {offsets = [0, 256], sizes = [8, 128], strides = [1, 1]} : vector<8x512xf32> to vector<8x128xf32>
    %33 = math.tanh %32 : vector<8x128xf32>
    %34 = vector.extract_strided_slice %19 {offsets = [0, 384], sizes = [8, 128], strides = [1, 1]} : vector<8x512xf32> to vector<8x128xf32>
    %35 = arith.negf %34 : vector<8x128xf32>
    %36 = math.exp %35 : vector<8x128xf32>
    %cst_19 = arith.constant 1.000000e+00 : f32
    %37 = vector.broadcast %cst_19 : f32 to vector<8x128xf32>
    %38 = arith.addf %37, %36 : vector<8x128xf32>
    %39 = arith.divf %37, %38 : vector<8x128xf32>
    %40 = arith.mulf %31, %11 : vector<8x128xf32>
    %41 = arith.mulf %25, %33 : vector<8x128xf32>
    %42 = arith.addf %40, %41 : vector<8x128xf32>
    %43 = math.tanh %42 : vector<8x128xf32>
    %44 = arith.mulf %39, %43 : vector<8x128xf32>
    %c1_i32 = arith.constant 1 : i32
    %c8_i32_20 = arith.constant 8 : i32
    %45 = arith.muli %c1_i32, %c8_i32_20 : i32
    %46 = tpu.assume_multiple %45, 8 : i32
    %47 = arith.index_cast %46 : i32 to index
    %c0_21 = arith.constant 0 : index
    %48 = vector.load %arg8[%47, %c0_21] : memref<32x512xf32, #tpu.memory_space<vmem>>, vector<8x512xf32>
    %49 = arith.truncf %44 : vector<8x128xf32> to vector<8x128xbf16>
    %c0_22 = arith.constant 0 : index
    %c0_23 = arith.constant 0 : index
    %50 = vector.load %arg3[%c0_22, %c0_23] : memref<128x512xbf16, #tpu.memory_space<vmem>>, vector<128x512xbf16>
    %cst_24 = arith.constant dense<0.000000e+00> : vector<8x512xf32>
    %51 = tpu.matmul %49, %50, %cst_24 {dimension_numbers = #tpu.dot_dimension_numbers<[1], [0], [0], [1], [0, 0, 1, 1], [], []>} : vector<8x128xbf16>, vector<128x512xbf16>, vector<8x512xf32> -> vector<8x512xf32>
    %52 = arith.addf %48, %51 : vector<8x512xf32>
    %53 = vector.extract_strided_slice %52 {offsets = [0, 0], sizes = [8, 128], strides = [1, 1]} : vector<8x512xf32> to vector<8x128xf32>
    %54 = arith.negf %53 : vector<8x128xf32>
    %55 = math.exp %54 : vector<8x128xf32>
    %cst_25 = arith.constant 1.000000e+00 : f32
    %56 = vector.broadcast %cst_25 : f32 to vector<8x128xf32>
    %57 = arith.addf %56, %55 : vector<8x128xf32>
    %58 = arith.divf %56, %57 : vector<8x128xf32>
    %59 = vector.extract_strided_slice %52 {offsets = [0, 128], sizes = [8, 128], strides = [1, 1]} : vector<8x512xf32> to vector<8x128xf32>
    %60 = arith.negf %59 : vector<8x128xf32>
    %61 = math.exp %60 : vector<8x128xf32>
    %cst_26 = arith.constant 1.000000e+00 : f32
    %62 = vector.broadcast %cst_26 : f32 to vector<8x128xf32>
    %63 = arith.addf %62, %61 : vector<8x128xf32>
    %64 = arith.divf %62, %63 : vector<8x128xf32>
    %65 = vector.extract_strided_slice %52 {offsets = [0, 256], sizes = [8, 128], strides = [1, 1]} : vector<8x512xf32> to vector<8x128xf32>
    %66 = math.tanh %65 : vector<8x128xf32>
    %67 = vector.extract_strided_slice %52 {offsets = [0, 384], sizes = [8, 128], strides = [1, 1]} : vector<8x512xf32> to vector<8x128xf32>
    %68 = arith.negf %67 : vector<8x128xf32>
    %69 = math.exp %68 : vector<8x128xf32>
    %cst_27 = arith.constant 1.000000e+00 : f32
    %70 = vector.broadcast %cst_27 : f32 to vector<8x128xf32>
    %71 = arith.addf %70, %69 : vector<8x128xf32>
    %72 = arith.divf %70, %71 : vector<8x128xf32>
    %73 = arith.mulf %64, %42 : vector<8x128xf32>
    %74 = arith.mulf %58, %66 : vector<8x128xf32>
    %75 = arith.addf %73, %74 : vector<8x128xf32>
    %76 = math.tanh %75 : vector<8x128xf32>
    %77 = arith.mulf %72, %76 : vector<8x128xf32>
    %c2_i32 = arith.constant 2 : i32
    %c8_i32_28 = arith.constant 8 : i32
    %78 = arith.muli %c2_i32, %c8_i32_28 : i32
    %79 = tpu.assume_multiple %78, 8 : i32
    %80 = arith.index_cast %79 : i32 to index
    %c0_29 = arith.constant 0 : index
    %81 = vector.load %arg8[%80, %c0_29] : memref<32x512xf32, #tpu.memory_space<vmem>>, vector<8x512xf32>
    %82 = arith.truncf %77 : vector<8x128xf32> to vector<8x128xbf16>
    %c0_30 = arith.constant 0 : index
    %c0_31 = arith.constant 0 : index
    %83 = vector.load %arg3[%c0_30, %c0_31] : memref<128x512xbf16, #tpu.memory_space<vmem>>, vector<128x512xbf16>
    %cst_32 = arith.constant dense<0.000000e+00> : vector<8x512xf32>
    %84 = tpu.matmul %82, %83, %cst_32 {dimension_numbers = #tpu.dot_dimension_numbers<[1], [0], [0], [1], [0, 0, 1, 1], [], []>} : vector<8x128xbf16>, vector<128x512xbf16>, vector<8x512xf32> -> vector<8x512xf32>
    %85 = arith.addf %81, %84 : vector<8x512xf32>
    %86 = vector.extract_strided_slice %85 {offsets = [0, 0], sizes = [8, 128], strides = [1, 1]} : vector<8x512xf32> to vector<8x128xf32>
    %87 = arith.negf %86 : vector<8x128xf32>
    %88 = math.exp %87 : vector<8x128xf32>
    %cst_33 = arith.constant 1.000000e+00 : f32
    %89 = vector.broadcast %cst_33 : f32 to vector<8x128xf32>
    %90 = arith.addf %89, %88 : vector<8x128xf32>
    %91 = arith.divf %89, %90 : vector<8x128xf32>
    %92 = vector.extract_strided_slice %85 {offsets = [0, 128], sizes = [8, 128], strides = [1, 1]} : vector<8x512xf32> to vector<8x128xf32>
    %93 = arith.negf %92 : vector<8x128xf32>
    %94 = math.exp %93 : vector<8x128xf32>
    %cst_34 = arith.constant 1.000000e+00 : f32
    %95 = vector.broadcast %cst_34 : f32 to vector<8x128xf32>
    %96 = arith.addf %95, %94 : vector<8x128xf32>
    %97 = arith.divf %95, %96 : vector<8x128xf32>
    %98 = vector.extract_strided_slice %85 {offsets = [0, 256], sizes = [8, 128], strides = [1, 1]} : vector<8x512xf32> to vector<8x128xf32>
    %99 = math.tanh %98 : vector<8x128xf32>
    %100 = vector.extract_strided_slice %85 {offsets = [0, 384], sizes = [8, 128], strides = [1, 1]} : vector<8x512xf32> to vector<8x128xf32>
    %101 = arith.negf %100 : vector<8x128xf32>
    %102 = math.exp %101 : vector<8x128xf32>
    %cst_35 = arith.constant 1.000000e+00 : f32
    %103 = vector.broadcast %cst_35 : f32 to vector<8x128xf32>
    %104 = arith.addf %103, %102 : vector<8x128xf32>
    %105 = arith.divf %103, %104 : vector<8x128xf32>
    %106 = arith.mulf %97, %75 : vector<8x128xf32>
    %107 = arith.mulf %91, %99 : vector<8x128xf32>
    %108 = arith.addf %106, %107 : vector<8x128xf32>
    %109 = math.tanh %108 : vector<8x128xf32>
    %110 = arith.mulf %105, %109 : vector<8x128xf32>
    %c3_i32 = arith.constant 3 : i32
    %c8_i32_36 = arith.constant 8 : i32
    %111 = arith.muli %c3_i32, %c8_i32_36 : i32
    %112 = tpu.assume_multiple %111, 8 : i32
    %113 = arith.index_cast %112 : i32 to index
    %c0_37 = arith.constant 0 : index
    %114 = vector.load %arg8[%113, %c0_37] : memref<32x512xf32, #tpu.memory_space<vmem>>, vector<8x512xf32>
    %115 = arith.truncf %110 : vector<8x128xf32> to vector<8x128xbf16>
    %c0_38 = arith.constant 0 : index
    %c0_39 = arith.constant 0 : index
    %116 = vector.load %arg3[%c0_38, %c0_39] : memref<128x512xbf16, #tpu.memory_space<vmem>>, vector<128x512xbf16>
    %cst_40 = arith.constant dense<0.000000e+00> : vector<8x512xf32>
    %117 = tpu.matmul %115, %116, %cst_40 {dimension_numbers = #tpu.dot_dimension_numbers<[1], [0], [0], [1], [0, 0, 1, 1], [], []>} : vector<8x128xbf16>, vector<128x512xbf16>, vector<8x512xf32> -> vector<8x512xf32>
    %118 = arith.addf %114, %117 : vector<8x512xf32>
    %119 = vector.extract_strided_slice %118 {offsets = [0, 0], sizes = [8, 128], strides = [1, 1]} : vector<8x512xf32> to vector<8x128xf32>
    %120 = arith.negf %119 : vector<8x128xf32>
    %121 = math.exp %120 : vector<8x128xf32>
    %cst_41 = arith.constant 1.000000e+00 : f32
    %122 = vector.broadcast %cst_41 : f32 to vector<8x128xf32>
    %123 = arith.addf %122, %121 : vector<8x128xf32>
    %124 = arith.divf %122, %123 : vector<8x128xf32>
    %125 = vector.extract_strided_slice %118 {offsets = [0, 128], sizes = [8, 128], strides = [1, 1]} : vector<8x512xf32> to vector<8x128xf32>
    %126 = arith.negf %125 : vector<8x128xf32>
    %127 = math.exp %126 : vector<8x128xf32>
    %cst_42 = arith.constant 1.000000e+00 : f32
    %128 = vector.broadcast %cst_42 : f32 to vector<8x128xf32>
    %129 = arith.addf %128, %127 : vector<8x128xf32>
    %130 = arith.divf %128, %129 : vector<8x128xf32>
    %131 = vector.extract_strided_slice %118 {offsets = [0, 256], sizes = [8, 128], strides = [1, 1]} : vector<8x512xf32> to vector<8x128xf32>
    %132 = math.tanh %131 : vector<8x128xf32>
    %133 = vector.extract_strided_slice %118 {offsets = [0, 384], sizes = [8, 128], strides = [1, 1]} : vector<8x512xf32> to vector<8x128xf32>
    %134 = arith.negf %133 : vector<8x128xf32>
    %135 = math.exp %134 : vector<8x128xf32>
    %cst_43 = arith.constant 1.000000e+00 : f32
    %136 = vector.broadcast %cst_43 : f32 to vector<8x128xf32>
    %137 = arith.addf %136, %135 : vector<8x128xf32>
    %138 = arith.divf %136, %137 : vector<8x128xf32>
    %139 = arith.mulf %130, %108 : vector<8x128xf32>
    %140 = arith.mulf %124, %132 : vector<8x128xf32>
    %141 = arith.addf %139, %140 : vector<8x128xf32>
    %142 = math.tanh %141 : vector<8x128xf32>
    %143 = arith.mulf %138, %142 : vector<8x128xf32>
    %c4_i32 = arith.constant 4 : i32
    %c0_44 = arith.constant 0 : index
    %c0_45 = arith.constant 0 : index
    %144 = vector.load %arg9[%c0_44, %c0_45] : memref<8x128xf32, #tpu.memory_space<vmem>>, vector<8x128xf32>
    tpu.vector_store %arg9[%c0_44, %c0_45], %143 {strides = array<i32>} : memref<8x128xf32, #tpu.memory_space<vmem>>, vector<8x128xf32>,
    %c0_46 = arith.constant 0 : index
    %c0_47 = arith.constant 0 : index
    %145 = vector.load %arg10[%c0_46, %c0_47] : memref<8x128xf32, #tpu.memory_space<vmem>>, vector<8x128xf32>
    tpu.vector_store %arg10[%c0_46, %c0_47], %141 {strides = array<i32>} : memref<8x128xf32, #tpu.memory_space<vmem>>, vector<8x128xf32>,
    %c1_i32_48 = arith.constant 1 : i32
    %146 = arith.cmpi eq, %arg0, %c1_i32_48 : i32
    %147 = arith.extui %146 : i1 to i32
    %c0_i32_49 = arith.constant 0 : i32
    %148 = arith.cmpi ne, %147, %c0_i32_49 : i32
    scf.if %148 {
      %149 = arith.truncf %143 : vector<8x128xf32> to vector<8x128xbf16>
      %c0_50 = arith.constant 0 : index
      %c0_51 = arith.constant 0 : index
      %150 = vector.load %arg5[%c0_50, %c0_51] : memref<128x128xbf16, #tpu.memory_space<vmem>>, vector<128x128xbf16>
      %cst_52 = arith.constant dense<0.000000e+00> : vector<8x128xf32>
      %151 = tpu.matmul %149, %150, %cst_52 {dimension_numbers = #tpu.dot_dimension_numbers<[1], [0], [0], [1], [0, 0, 1, 1], [], []>} : vector<8x128xbf16>, vector<128x128xbf16>, vector<8x128xf32> -> vector<8x128xf32>
      %c0_53 = arith.constant 0 : index
      %c0_54 = arith.constant 0 : index
      %152 = vector.load %arg6[%c0_53, %c0_54] : memref<1x128xf32, #tpu.memory_space<vmem>>, vector<1x128xf32>
      %153 = vector.broadcast %152 : vector<1x128xf32> to vector<8x128xf32>
      %154 = arith.addf %151, %153 : vector<8x128xf32>
      %155 = arith.negf %154 : vector<8x128xf32>
      %156 = math.exp %155 : vector<8x128xf32>
      %cst_55 = arith.constant 1.000000e+00 : f32
      %157 = vector.broadcast %cst_55 : f32 to vector<8x128xf32>
      %158 = arith.addf %157, %156 : vector<8x128xf32>
      %159 = arith.divf %157, %158 : vector<8x128xf32>
      %c0_56 = arith.constant 0 : index
      %c0_57 = arith.constant 0 : index
      %160 = vector.load %arg7[%c0_56, %c0_57] : memref<8x128xf32, #tpu.memory_space<vmem>>, vector<8x128xf32>
      tpu.vector_store %arg7[%c0_56, %c0_57], %159 {strides = array<i32>} : memref<8x128xf32, #tpu.memory_space<vmem>>, vector<8x128xf32>,
    } else {
    }
    return
  }
  func.func @transform_0(%arg0: i32) -> (i32, i32) {
    %c0_i32 = arith.constant 0 : i32
    %c0_i32_0 = arith.constant 0 : i32
    return %arg0, %c0_i32 : i32, i32
  }
  func.func @transform_1(%arg0: i32) -> (i32, i32) {
    %c0_i32 = arith.constant 0 : i32
    %c0_i32_0 = arith.constant 0 : i32
    %c0_i32_1 = arith.constant 0 : i32
    return %c0_i32, %c0_i32_0 : i32, i32
  }
  func.func @transform_2(%arg0: i32) -> (i32, i32) {
    %c0_i32 = arith.constant 0 : i32
    %c0_i32_0 = arith.constant 0 : i32
    %c0_i32_1 = arith.constant 0 : i32
    return %c0_i32, %c0_i32_0 : i32, i32
  }
  func.func @transform_3(%arg0: i32) -> (i32, i32) {
    %c0_i32 = arith.constant 0 : i32
    %c0_i32_0 = arith.constant 0 : i32
    %c0_i32_1 = arith.constant 0 : i32
    return %c0_i32, %c0_i32_0 : i32, i32
  }
  func.func @transform_4(%arg0: i32) -> (i32, i32) {
    %c0_i32 = arith.constant 0 : i32
    %c0_i32_0 = arith.constant 0 : i32
    %c0_i32_1 = arith.constant 0 : i32
    return %c0_i32, %c0_i32_0 : i32, i32
  }
  func.func @transform_5(%arg0: i32) -> (i32, i32) {
    %c0_i32 = arith.constant 0 : i32
    %c0_i32_0 = arith.constant 0 : i32
    %c0_i32_1 = arith.constant 0 : i32
    return %c0_i32, %c0_i32_0 : i32, i32
  }
  func.func @transform_6(%arg0: i32) -> (i32, i32) {
    %c0_i32 = arith.constant 0 : i32
    %c0_i32_0 = arith.constant 0 : i32
    %c0_i32_1 = arith.constant 0 : i32
    return %c0_i32, %c0_i32_0 : i32, i32
  }
}

</mosaic_0001>

<llo_original>
// kernel: nlpnet_forward.1
$region0: #{nlpnet_forward.1}
  #allocation0 [shape = 'u32[]', space=smem, size = 0x4, offset = 0x4, fixed_abs, tag = 'smem constant byte address 0x4 - core index']
  #allocation1 [shape = 'u32[72,128]{1,0:T(1,128)}', space=vmem, size = 0x9000, scoped, tag = 'internal scratch']
  #allocation2 [shape = 'f32[32,512]{1,0:T(8,128)}', space=vmem, size = 0x10000, scoped, tag = 'scratch operand']
  #allocation3 [shape = 'f32[8,128]{1,0:T(8,128)}', space=vmem, size = 0x1000, scoped, tag = 'scratch operand']
  #allocation4 [shape = 'f32[8,128]{1,0:T(8,128)}', space=vmem, size = 0x1000, scoped, tag = 'scratch operand']
  %s0 = inlined_call_operand.vmem [shape: bf16[64,32], index: 0, kind: input, shape index: {}]
  %s1 = inlined_call_operand.vmem [shape: bf16[32,512], index: 1, kind: input, shape index: {}]
  %s2 = inlined_call_operand.vmem [shape: bf16[128,512], index: 2, kind: input, shape index: {}]
  %s3 = inlined_call_operand.vmem [shape: f32[1,512], index: 3, kind: input, shape index: {}]
  %s4 = inlined_call_operand.vmem [shape: bf16[128,128], index: 4, kind: input, shape index: {}]
  %s5 = inlined_call_operand.vmem [shape: f32[1,128], index: 5, kind: input, shape index: {}]
  %s6 = inlined_call_operand.vmem [shape: f32[8,128], index: 6, kind: output, shape index: {}]
  %s7 = sld [smem:[#allocation0]]
  $region65: #{nlpnet_forward.1} parent=0
    _
  %s9 = ssub.s32 1, %s7
  %s10 = scalar_select 0, %s9, %s7
  loop: start=0, step=1, limit=4
  $region2: #{nlpnet_forward.1} parent=0 // loop_pre_header
    _
  $region3: #{nlpnet_forward.1} parent=0 // loop_header
    %s12 = sphi 0, %s16
    %p13 = scmp.ge.s32.totalorder %s12, 4
    %s22 = sphi 0, %s24
    %s25 = sphi 0, %s22
    %s26 = sphi 0, %s25
    %s42 = sphi 0, %s26
    %s46 = sphi 0, %s46
    %s48 = sphi 0, %s46
    %s49 = sphi 0, %s48
    %s63 = sphi 0, %s49
    %s67 = sphi 0, %s67
    %s69 = sphi 0, %s67
    %s70 = sphi 0, %s69
    %s84 = sphi 0, %s70
    %s88 = sphi 0, %s88
    %s90 = sphi 0, %s88
    %s91 = sphi 0, %s90
    %s105 = sphi 0, %s91
    %s109 = sphi 0, %s109
    %s111 = sphi 0, %s109
    %s112 = sphi 0, %s111
    %s126 = sphi 0, %s112
    %s130 = sphi 0, %s130
    %s132 = sphi 0, %s130
    %s133 = sphi 0, %s132
    %s147 = sphi 0, %s133
    %s151 = sphi 0, %s151
    %s153 = sphi 0, %s151
    %s154 = sphi 0, %s153
    %s168 = sphi 0, %s154
  $region4: #{nlpnet_forward.1} parent=0 // loop_header_branch
    %15 = sbr.rel (%p13) target = $region8
  $region5: #{nlpnet_forward.1} parent=0 // loop_body
    %s17 = ssub.s32 %s12, 1
    %s18 = ssub.s32 %s12, 2
    %s19 = sadd.s32 %s12, 1
    %s20 = ssub.s32 %s12, %s19
    %p21 = scmp.eq.s32.totalorder %s20, 0
    %s23 = sadd.s32 %s22, 1
    %s24 = scalar_select %p21, %s22, %s23
    %p27 = pneg %p21
    %p28 = scmp.eq.s32.totalorder %s12, 1
    %p29 = por %p27, %p28
    %p30 = scmp.ne.s32.totalorder %s22, %s25
    %p31 = scmp.eq.s32.totalorder %s12, 0
    %p32 = por %p30, %p31
    %p33 = scmp.ne.s32.totalorder %s22, %s25
    %p34 = scmp.eq.s32.totalorder %s17, 1
    %p35 = por %p33, %p34
    %p36 = scmp.ne.s32.totalorder %s25, %s26
    %p37 = scmp.eq.s32.totalorder %s17, 0
    %p38 = por %p36, %p37
    %p39 = scmp.ne.s32.totalorder %s25, %s26
    %p40 = scmp.eq.s32.totalorder %s18, 1
    %p41 = por %p39, %p40
    %p43 = scmp.ne.s32.totalorder %s26, %s42
    %p44 = scmp.eq.s32.totalorder %s18, 0
    %p45 = por %p43, %p44
    %s47 = sadd.s32 %s46, 1
    %p50 = scmp.eq.s32.totalorder %s12, 1
    %p51 = scmp.ne.s32.totalorder %s46, %s48
    %p52 = scmp.eq.s32.totalorder %s12, 0
    %p53 = por %p51, %p52
    %p54 = scmp.ne.s32.totalorder %s46, %s48
    %p55 = scmp.eq.s32.totalorder %s17, 1
    %p56 = por %p54, %p55
    %p57 = scmp.ne.s32.totalorder %s48, %s49
    %p58 = scmp.eq.s32.totalorder %s17, 0
    %p59 = por %p57, %p58
    %p60 = scmp.ne.s32.totalorder %s48, %s49
    %p61 = scmp.eq.s32.totalorder %s18, 1
    %p62 = por %p60, %p61
    %p64 = scmp.ne.s32.totalorder %s49, %s63
    %p65 = scmp.eq.s32.totalorder %s18, 0
    %p66 = por %p64, %p65
    %s68 = sadd.s32 %s67, 1
    %p71 = scmp.eq.s32.totalorder %s12, 1
    %p72 = scmp.ne.s32.totalorder %s67, %s69
    %p73 = scmp.eq.s32.totalorder %s12, 0
    %p74 = por %p72, %p73
    %p75 = scmp.ne.s32.totalorder %s67, %s69
    %p76 = scmp.eq.s32.totalorder %s17, 1
    %p77 = por %p75, %p76
    %p78 = scmp.ne.s32.totalorder %s69, %s70
    %p79 = scmp.eq.s32.totalorder %s17, 0
    %p80 = por %p78, %p79
    %p81 = scmp.ne.s32.totalorder %s69, %s70
    %p82 = scmp.eq.s32.totalorder %s18, 1
    %p83 = por %p81, %p82
    %p85 = scmp.ne.s32.totalorder %s70, %s84
    %p86 = scmp.eq.s32.totalorder %s18, 0
    %p87 = por %p85, %p86
    %s89 = sadd.s32 %s88, 1
    %p92 = scmp.eq.s32.totalorder %s12, 1
    %p93 = scmp.ne.s32.totalorder %s88, %s90
    %p94 = scmp.eq.s32.totalorder %s12, 0
    %p95 = por %p93, %p94
    %p96 = scmp.ne.s32.totalorder %s88, %s90
    %p97 = scmp.eq.s32.totalorder %s17, 1
    %p98 = por %p96, %p97
    %p99 = scmp.ne.s32.totalorder %s90, %s91
    %p100 = scmp.eq.s32.totalorder %s17, 0
    %p101 = por %p99, %p100
    %p102 = scmp.ne.s32.totalorder %s90, %s91
    %p103 = scmp.eq.s32.totalorder %s18, 1
    %p104 = por %p102, %p103
    %p106 = scmp.ne.s32.totalorder %s91, %s105
    %p107 = scmp.eq.s32.totalorder %s18, 0
    %p108 = por %p106, %p107
    %s110 = sadd.s32 %s109, 1
    %p113 = scmp.eq.s32.totalorder %s12, 1
    %p114 = scmp.ne.s32.totalorder %s109, %s111
    %p115 = scmp.eq.s32.totalorder %s12, 0
    %p116 = por %p114, %p115
    %p117 = scmp.ne.s32.totalorder %s109, %s111
    %p118 = scmp.eq.s32.totalorder %s17, 1
    %p119 = por %p117, %p118
    %p120 = scmp.ne.s32.totalorder %s111, %s112
    %p121 = scmp.eq.s32.totalorder %s17, 0
    %p122 = por %p120, %p121
    %p123 = scmp.ne.s32.totalorder %s111, %s112
    %p124 = scmp.eq.s32.totalorder %s18, 1
    %p125 = por %p123, %p124
    %p127 = scmp.ne.s32.totalorder %s112, %s126
    %p128 = scmp.eq.s32.totalorder %s18, 0
    %p129 = por %p127, %p128
    %s131 = sadd.s32 %s130, 1
    %p134 = scmp.eq.s32.totalorder %s12, 1
    %p135 = scmp.ne.s32.totalorder %s130, %s132
    %p136 = scmp.eq.s32.totalorder %s12, 0
    %p137 = por %p135, %p136
    %p138 = scmp.ne.s32.totalorder %s130, %s132
    %p139 = scmp.eq.s32.totalorder %s17, 1
    %p140 = por %p138, %p139
    %p141 = scmp.ne.s32.totalorder %s132, %s133
    %p142 = scmp.eq.s32.totalorder %s17, 0
    %p143 = por %p141, %p142
    %p144 = scmp.ne.s32.totalorder %s132, %s133
    %p145 = scmp.eq.s32.totalorder %s18, 1
    %p146 = por %p144, %p145
    %p148 = scmp.ne.s32.totalorder %s133, %s147
    %p149 = scmp.eq.s32.totalorder %s18, 0
    %p150 = por %p148, %p149
    %s152 = sadd.s32 %s151, 1
    %p155 = scmp.eq.s32.totalorder %s12, 1
    %p156 = scmp.ne.s32.totalorder %s151, %s153
    %p157 = scmp.eq.s32.totalorder %s12, 0
    %p158 = por %p156, %p157
    %p159 = scmp.ne.s32.totalorder %s151, %s153
    %p160 = scmp.eq.s32.totalorder %s17, 1
    %p161 = por %p159, %p160
    %p162 = scmp.ne.s32.totalorder %s153, %s154
    %p163 = scmp.eq.s32.totalorder %s17, 0
    %p164 = por %p162, %p163
    %p165 = scmp.ne.s32.totalorder %s153, %s154
    %p166 = scmp.eq.s32.totalorder %s18, 1
    %p167 = por %p165, %p166
    %p169 = scmp.ne.s32.totalorder %s154, %s168
    %p170 = scmp.eq.s32.totalorder %s18, 0
    %p171 = por %p169, %p170
    %p172 = scmp.le.s32.totalorder 1, %s12
    %p173 = scmp.lt.s32.totalorder %s12, 3
    %p174 = pnand %p172, %p173
    %p175 = pneg %p174
    // Predicated region
    $region9: #{nlpnet_forward.1} parent=5 // pred_check
      _
    $region10: #{nlpnet_forward.1} parent=5 // pred_check_branch
      %177 = sbr.rel (%p174) target = $region12
    $region11: #{nlpnet_forward.1} parent=5 // pred_region
      %s178 = ssub.s32 %s12, 1
      // Predicated region
      $region13: #{nlpnet_forward.1} parent=11 // pred_check
        %p179 = pneg %p59
      $region14: #{nlpnet_forward.1} parent=11 // pred_check_branch
        %181 = sbr.rel (%p179) target = $region16
      $region15: #{nlpnet_forward.1} parent=11 // pred_region
        _
      $region16: #{nlpnet_forward.1} parent=11 // pred_fallthru
        _
      // Predicated region
      $region17: #{nlpnet_forward.1} parent=11 // pred_check
        %p182 = pneg %p80
      $region18: #{nlpnet_forward.1} parent=11 // pred_check_branch
        %184 = sbr.rel (%p182) target = $region20
      $region19: #{nlpnet_forward.1} parent=11 // pred_region
        _
      $region20: #{nlpnet_forward.1} parent=11 // pred_fallthru
        _
      // Predicated region
      $region21: #{nlpnet_forward.1} parent=11 // pred_check
        %p185 = pneg %p101
      $region22: #{nlpnet_forward.1} parent=11 // pred_check_branch
        %187 = sbr.rel (%p185) target = $region24
      $region23: #{nlpnet_forward.1} parent=11 // pred_region
        _
      $region24: #{nlpnet_forward.1} parent=11 // pred_fallthru
        _
      // Predicated region
      $region25: #{nlpnet_forward.1} parent=11 // pred_check
        %p188 = pneg %p122
      $region26: #{nlpnet_forward.1} parent=11 // pred_check_branch
        %190 = sbr.rel (%p188) target = $region28
      $region27: #{nlpnet_forward.1} parent=11 // pred_region
        _
      $region28: #{nlpnet_forward.1} parent=11 // pred_fallthru
        _
      // Predicated region
      $region29: #{nlpnet_forward.1} parent=11 // pred_check
        %p191 = pneg %p143
      $region30: #{nlpnet_forward.1} parent=11 // pred_check_branch
        %193 = sbr.rel (%p191) target = $region32
      $region31: #{nlpnet_forward.1} parent=11 // pred_region
        _
      $region32: #{nlpnet_forward.1} parent=11 // pred_fallthru
        _
    $region12: #{nlpnet_forward.1} parent=5 // pred_fallthru
      _
    %p194 = scmp.lt.s32.totalorder %s12, 2
    // Predicated region
    $region33: #{nlpnet_forward.1} parent=5 // pred_check
      %p195 = pneg %p194
    $region34: #{nlpnet_forward.1} parent=5 // pred_check_branch
      %197 = sbr.rel (%p195) target = $region36
    $region35: #{nlpnet_forward.1} parent=5 // pred_region
      // Predicated region
      $region37: #{nlpnet_forward.1} parent=35 // pred_check
        %p198 = pneg %p32
      $region38: #{nlpnet_forward.1} parent=35 // pred_check_branch
        %200 = sbr.rel (%p198) target = $region40
      $region39: #{nlpnet_forward.1} parent=35 // pred_region
        %s201 = smul.u32 4, %s12
        %p202 = scmp.lt.s32.totalorder %s201, 7
        %s203 = scalar_select %p202, %s201, 7
        %s204 = smul.addr %s203, 4
        %s205 = scalar_lea.vmem %s0, %s204
        %s206 = smul.u32 4, %s12
      $region40: #{nlpnet_forward.1} parent=35 // pred_fallthru
        _
    $region36: #{nlpnet_forward.1} parent=5 // pred_fallthru
      _
    %p207 = scmp.le.s32.totalorder 1, %s12
    %p208 = scmp.lt.s32.totalorder %s12, 3
    %p209 = pnand %p207, %p208
    %p210 = pneg %p209
    // Predicated region
    $region41: #{nlpnet_forward.1} parent=5 // pred_check
      _
    $region42: #{nlpnet_forward.1} parent=5 // pred_check_branch
      %212 = sbr.rel (%p209) target = $region44
    $region43: #{nlpnet_forward.1} parent=5 // pred_region
      %s213 = ssub.s32 %s12, 1
      %s214 = smul.u32 4, %s17
      %p215 = scmp.lt.s32.totalorder %s214, 7
      %s216 = scalar_select %p215, %s214, 7
      %s217 = smul.addr %s216, 4
      %s218 = scalar_lea.vmem %s0, %s217
      %p219 = pneg %p38
      %p220 = pneg %p35
      %p221 = pneg %p59
      %p222 = pneg %p56
      %p223 = pneg %p80
      %p224 = pneg %p77
      %p225 = pneg %p101
      %p226 = pneg %p98
      %p227 = pneg %p122
      %p228 = pneg %p119
      %p229 = pneg %p143
      %p230 = pneg %p140
      %p231 = pneg %p164
      %p232 = pneg %p161
      %s233 = smul.u32 4, %s17
      %p234 = scmp.lt.s32.totalorder %s233, 7
      %s235 = scalar_select %p234, %s233, 7
      %s236 = smul.addr %s235, 4
      %s237 = scalar_lea.vmem %s0, %s236
      %s238 = smul.u32 4, %s17
      %p240 = scmp.eq.s32.totalorder %s17, 0
      // Predicated region
      $region45: #{nlpnet_forward.1} parent=43 // pred_check
        %p241 = pneg %p240
      $region46: #{nlpnet_forward.1} parent=43 // pred_check_branch
        %243 = sbr.rel (%p241) target = $region48
      $region47: #{nlpnet_forward.1} parent=43 // pred_region
        %244 = vst [vmem:[#allocation3] sm:$0xff] 0.0
        %245 = vst [vmem:[#allocation4] sm:$0xff] 0.0
      $region48: #{nlpnet_forward.1} parent=43 // pred_fallthru
        _
      %v246 = vld [vmem:[%s237] sm:$0xf]
      %v247 = vld [vmem:[%s237 + $0x4] sm:$0xf]
      %v248 = vld [vmem:[%s237 + $0x8] sm:$0xf]
      %v249 = vld [vmem:[%s237 + $0xc] sm:$0xf]
      %v250 = vld [vmem:[%s1] sm:$0xff]
      %v251 = vld [vmem:[%s1 + $0x8] sm:$0xff]
      %v252 = vld [vmem:[%s1 + $0x10] sm:$0xff]
      %v253 = vld [vmem:[%s1 + $0x18] sm:$0xff]
      %v254 = vld [vmem:[%s1 + $0x20] sm:$0xff]
      %v255 = vld [vmem:[%s1 + $0x28] sm:$0xff]
      %v256 = vld [vmem:[%s1 + $0x30] sm:$0xff]
      %v257 = vld [vmem:[%s1 + $0x38] sm:$0xff]
      %v258 = vld [vmem:[%s3] sm:$0xf]
      %v260 = vperm.slane %v258, 0
      %v261 = vperm.slane %v258, 1
      %v262 = vperm.slane %v258, 2
      %v263 = vperm.slane %v258, 3
      %v272 = vunpack.c.l.b16 %v246
      %v273 = vunpack.c.l.b16 %v247
      %v274 = vunpack.c.l.b16 %v248
      %v275 = vunpack.c.l.b16 %v249
      %v276 = vpack.c.b16 %v273, %v272
      %v277 = vpack.c.b16 %v275, %v274
      %v286 = vunpack.c.l.b16 %v250
      %v287 = vunpack.c.h.b16 %v250
      %v288 = vunpack.c.l.b16 %v251
      %v289 = vunpack.c.h.b16 %v251
      %v290 = vunpack.c.l.b16 %v252
      %v291 = vunpack.c.h.b16 %v252
      %v292 = vunpack.c.l.b16 %v253
      %v293 = vunpack.c.h.b16 %v253
      %v294 = vunpack.c.l.b16 %v254
      %v295 = vunpack.c.h.b16 %v254
      %v296 = vunpack.c.l.b16 %v255
      %v297 = vunpack.c.h.b16 %v255
      %v298 = vunpack.c.l.b16 %v256
      %v299 = vunpack.c.h.b16 %v256
      %v300 = vunpack.c.l.b16 %v257
      %v301 = vunpack.c.h.b16 %v257
      %v302 = vpack.c.b16 %v290, %v286
      %v303 = vpack.c.b16 %v291, %v287
      %v304 = vpack.c.b16 %v292, %v288
      %v305 = vpack.c.b16 %v293, %v289
      %v306 = vpack.c.b16 %v298, %v294
      %v307 = vpack.c.b16 %v299, %v295
      %v308 = vpack.c.b16 %v300, %v296
      %v309 = vpack.c.b16 %v301, %v297
      %vm318 = vcmask 261120
      %v320 = vsel %vm318, %v276, 0
      %v323 = vsel %vm318, %v277, 0
      %325 = vmatpush.bf16.msra.mxu0 0
      %326 = vmatpush.bf16.msra.mxu0 0
      %327 = vmatpush.bf16.msra.mxu0 0
      %328 = vmatpush.bf16.msra.mxu0 0
      %329 = vmatpush.bf16.msra.mxu0 0
      %330 = vmatpush.bf16.msra.mxu0 0
      %331 = vmatpush.bf16.msra.mxu0 %v306
      %332 = vmatpush.bf16.msra.mxu0 %v302
      %333 = vmatmul.bf16.gmra.mxu0 %v320
      %v334 = vpop.f32.mrf.mxu0
      %v335 = vadd.f32 %v260, %v334
      %v336 = vpop.f32.mrf.mxu0
      %v337 = vadd.f32 %v260, %v336
      %338 = vmatmul.bf16.gmra.mxu0 %v323
      %v339 = vpop.f32.mrf.mxu0
      %v340 = vadd.f32 %v260, %v339
      %v341 = vpop.f32.mrf.mxu0
      %v342 = vadd.f32 %v260, %v341
      %343 = vdwg.mxu0
      %344 = vmatpush.bf16.msra.mxu0 0
      %345 = vmatpush.bf16.msra.mxu0 0
      %346 = vmatpush.bf16.msra.mxu0 0
      %347 = vmatpush.bf16.msra.mxu0 0
      %348 = vmatpush.bf16.msra.mxu0 0
      %349 = vmatpush.bf16.msra.mxu0 0
      %350 = vmatpush.bf16.msra.mxu0 %v307
      %351 = vmatpush.bf16.msra.mxu0 %v303
      %352 = vmatmul.bf16.gmra.mxu0 %v320
      %v353 = vpop.f32.mrf.mxu0
      %v354 = vadd.f32 %v261, %v353
      %v355 = vpop.f32.mrf.mxu0
      %v356 = vadd.f32 %v261, %v355
      %357 = vmatmul.bf16.gmra.mxu0 %v323
      %v358 = vpop.f32.mrf.mxu0
      %v359 = vadd.f32 %v261, %v358
      %v360 = vpop.f32.mrf.mxu0
      %v361 = vadd.f32 %v261, %v360
      %362 = vdwg.mxu0
      %363 = vmatpush.bf16.msra.mxu0 0
      %364 = vmatpush.bf16.msra.mxu0 0
      %365 = vmatpush.bf16.msra.mxu0 0
      %366 = vmatpush.bf16.msra.mxu0 0
      %367 = vmatpush.bf16.msra.mxu0 0
      %368 = vmatpush.bf16.msra.mxu0 0
      %369 = vmatpush.bf16.msra.mxu0 %v308
      %370 = vmatpush.bf16.msra.mxu0 %v304
      %371 = vmatmul.bf16.gmra.mxu0 %v320
      %v372 = vpop.f32.mrf.mxu0
      %v373 = vadd.f32 %v262, %v372
      %v374 = vpop.f32.mrf.mxu0
      %v375 = vadd.f32 %v262, %v374
      %376 = vmatmul.bf16.gmra.mxu0 %v323
      %v377 = vpop.f32.mrf.mxu0
      %v378 = vadd.f32 %v262, %v377
      %v379 = vpop.f32.mrf.mxu0
      %v380 = vadd.f32 %v262, %v379
      %381 = vdwg.mxu0
      %382 = vmatpush.bf16.msra.mxu0 0
      %383 = vmatpush.bf16.msra.mxu0 0
      %384 = vmatpush.bf16.msra.mxu0 0
      %385 = vmatpush.bf16.msra.mxu0 0
      %386 = vmatpush.bf16.msra.mxu0 0
      %387 = vmatpush.bf16.msra.mxu0 0
      %388 = vmatpush.bf16.msra.mxu0 %v309
      %389 = vmatpush.bf16.msra.mxu0 %v305
      %390 = vmatmul.bf16.gmra.mxu0 %v320
      %v391 = vpop.f32.mrf.mxu0
      %v392 = vadd.f32 %v263, %v391
      %v393 = vpop.f32.mrf.mxu0
      %v394 = vadd.f32 %v263, %v393
      %395 = vmatmul.bf16.gmra.mxu0 %v323
      %v396 = vpop.f32.mrf.mxu0
      %v397 = vadd.f32 %v263, %v396
      %v398 = vpop.f32.mrf.mxu0
      %v399 = vadd.f32 %v263, %v398
      %400 = vdwg.mxu0
      %401 = vst [vmem:[#allocation2] sm:$0xff] %v335
      %402 = vst [vmem:[#allocation2 + $0x8] sm:$0xff] %v354
      %403 = vst [vmem:[#allocation2 + $0x10] sm:$0xff] %v373
      %404 = vst [vmem:[#allocation2 + $0x18] sm:$0xff] %v392
      %405 = vst [vmem:[#allocation2 + $0x20] sm:$0xff] %v337
      %406 = vst [vmem:[#allocation2 + $0x28] sm:$0xff] %v356
      %407 = vst [vmem:[#allocation2 + $0x30] sm:$0xff] %v375
      %408 = vst [vmem:[#allocation2 + $0x38] sm:$0xff] %v394
      %409 = vst [vmem:[#allocation2 + $0x40] sm:$0xff] %v340
      %410 = vst [vmem:[#allocation2 + $0x48] sm:$0xff] %v359
      %411 = vst [vmem:[#allocation2 + $0x50] sm:$0xff] %v378
      %412 = vst [vmem:[#allocation2 + $0x58] sm:$0xff] %v397
      %413 = vst [vmem:[#allocation2 + $0x60] sm:$0xff] %v342
      %414 = vst [vmem:[#allocation2 + $0x68] sm:$0xff] %v361
      %415 = vst [vmem:[#allocation2 + $0x70] sm:$0xff] %v380
      %416 = vst [vmem:[#allocation2 + $0x78] sm:$0xff] %v399
      %v417 = vld [vmem:[#allocation3] sm:$0xff]
      %v418 = vld [vmem:[#allocation4] sm:$0xff]
      %s419 = smul.u32 0, 4
      %s420 = smul.addr %s419, 8
      %s421 = scalar_lea.vmem [#allocation2], %s420
      %v422 = vld [vmem:[%s421] sm:$0xff]
      %v423 = vld [vmem:[%s421 + $0x8] sm:$0xff]
      %v424 = vld [vmem:[%s421 + $0x10] sm:$0xff]
      %v425 = vld [vmem:[%s421 + $0x18] sm:$0xff]
      %v426 = vpack.c.bf16 %v417, %v417
      %v427 = vld [vmem:[%s2] sm:$0xff]
      %v428 = vld [vmem:[%s2 + $0x8] sm:$0xff]
      %v429 = vld [vmem:[%s2 + $0x10] sm:$0xff]
      %v430 = vld [vmem:[%s2 + $0x18] sm:$0xff]
      %v431 = vld [vmem:[%s2 + $0x20] sm:$0xff]
      %v432 = vld [vmem:[%s2 + $0x28] sm:$0xff]
      %v433 = vld [vmem:[%s2 + $0x30] sm:$0xff]
      %v434 = vld [vmem:[%s2 + $0x38] sm:$0xff]
      %v435 = vld [vmem:[%s2 + $0x40] sm:$0xff]
      %v436 = vld [vmem:[%s2 + $0x48] sm:$0xff]
      %v437 = vld [vmem:[%s2 + $0x50] sm:$0xff]
      %v438 = vld [vmem:[%s2 + $0x58] sm:$0xff]
      %v439 = vld [vmem:[%s2 + $0x60] sm:$0xff]
      %v440 = vld [vmem:[%s2 + $0x68] sm:$0xff]
      %v441 = vld [vmem:[%s2 + $0x70] sm:$0xff]
      %v442 = vld [vmem:[%s2 + $0x78] sm:$0xff]
      %v443 = vld [vmem:[%s2 + $0x80] sm:$0xff]
      %v444 = vld [vmem:[%s2 + $0x88] sm:$0xff]
      %v445 = vld [vmem:[%s2 + $0x90] sm:$0xff]
      %v446 = vld [vmem:[%s2 + $0x98] sm:$0xff]
      %v447 = vld [vmem:[%s2 + $0xa0] sm:$0xff]
      %v448 = vld [vmem:[%s2 + $0xa8] sm:$0xff]
      %v449 = vld [vmem:[%s2 + $0xb0] sm:$0xff]
      %v450 = vld [vmem:[%s2 + $0xb8] sm:$0xff]
      %v451 = vld [vmem:[%s2 + $0xc0] sm:$0xff]
      %v452 = vld [vmem:[%s2 + $0xc8] sm:$0xff]
      %v453 = vld [vmem:[%s2 + $0xd0] sm:$0xff]
      %v454 = vld [vmem:[%s2 + $0xd8] sm:$0xff]
      %v455 = vld [vmem:[%s2 + $0xe0] sm:$0xff]
      %v456 = vld [vmem:[%s2 + $0xe8] sm:$0xff]
      %v457 = vld [vmem:[%s2 + $0xf0] sm:$0xff]
      %v458 = vld [vmem:[%s2 + $0xf8] sm:$0xff]
      %v491 = vunpack.c.l.b16 %v427
      %v492 = vunpack.c.h.b16 %v427
      %v493 = vunpack.c.l.b16 %v428
      %v494 = vunpack.c.h.b16 %v428
      %v495 = vunpack.c.l.b16 %v429
      %v496 = vunpack.c.h.b16 %v429
      %v497 = vunpack.c.l.b16 %v430
      %v498 = vunpack.c.h.b16 %v430
      %v499 = vunpack.c.l.b16 %v431
      %v500 = vunpack.c.h.b16 %v431
      %v501 = vunpack.c.l.b16 %v432
      %v502 = vunpack.c.h.b16 %v432
      %v503 = vunpack.c.l.b16 %v433
      %v504 = vunpack.c.h.b16 %v433
      %v505 = vunpack.c.l.b16 %v434
      %v506 = vunpack.c.h.b16 %v434
      %v507 = vunpack.c.l.b16 %v435
      %v508 = vunpack.c.h.b16 %v435
      %v509 = vunpack.c.l.b16 %v436
      %v510 = vunpack.c.h.b16 %v436
      %v511 = vunpack.c.l.b16 %v437
      %v512 = vunpack.c.h.b16 %v437
      %v513 = vunpack.c.l.b16 %v438
      %v514 = vunpack.c.h.b16 %v438
      %v515 = vunpack.c.l.b16 %v439
      %v516 = vunpack.c.h.b16 %v439
      %v517 = vunpack.c.l.b16 %v440
      %v518 = vunpack.c.h.b16 %v440
      %v519 = vunpack.c.l.b16 %v441
      %v520 = vunpack.c.h.b16 %v441
      %v521 = vunpack.c.l.b16 %v442
      %v522 = vunpack.c.h.b16 %v442
      %v523 = vunpack.c.l.b16 %v443
      %v524 = vunpack.c.h.b16 %v443
      %v525 = vunpack.c.l.b16 %v444
      %v526 = vunpack.c.h.b16 %v444
      %v527 = vunpack.c.l.b16 %v445
      %v528 = vunpack.c.h.b16 %v445
      %v529 = vunpack.c.l.b16 %v446
      %v530 = vunpack.c.h.b16 %v446
      %v531 = vunpack.c.l.b16 %v447
      %v532 = vunpack.c.h.b16 %v447
      %v533 = vunpack.c.l.b16 %v448
      %v534 = vunpack.c.h.b16 %v448
      %v535 = vunpack.c.l.b16 %v449
      %v536 = vunpack.c.h.b16 %v449
      %v537 = vunpack.c.l.b16 %v450
      %v538 = vunpack.c.h.b16 %v450
      %v539 = vunpack.c.l.b16 %v451
      %v540 = vunpack.c.h.b16 %v451
      %v541 = vunpack.c.l.b16 %v452
      %v542 = vunpack.c.h.b16 %v452
      %v543 = vunpack.c.l.b16 %v453
      %v544 = vunpack.c.h.b16 %v453
      %v545 = vunpack.c.l.b16 %v454
      %v546 = vunpack.c.h.b16 %v454
      %v547 = vunpack.c.l.b16 %v455
      %v548 = vunpack.c.h.b16 %v455
      %v549 = vunpack.c.l.b16 %v456
      %v550 = vunpack.c.h.b16 %v456
      %v551 = vunpack.c.l.b16 %v457
      %v552 = vunpack.c.h.b16 %v457
      %v553 = vunpack.c.l.b16 %v458
      %v554 = vunpack.c.h.b16 %v458
      %v555 = vpack.c.b16 %v495, %v491
      %v556 = vpack.c.b16 %v496, %v492
      %v557 = vpack.c.b16 %v497, %v493
      %v558 = vpack.c.b16 %v498, %v494
      %v559 = vpack.c.b16 %v503, %v499
      %v560 = vpack.c.b16 %v504, %v500
      %v561 = vpack.c.b16 %v505, %v501
      %v562 = vpack.c.b16 %v506, %v502
      %v563 = vpack.c.b16 %v511, %v507
      %v564 = vpack.c.b16 %v512, %v508
      %v565 = vpack.c.b16 %v513, %v509
      %v566 = vpack.c.b16 %v514, %v510
      %v567 = vpack.c.b16 %v519, %v515
      %v568 = vpack.c.b16 %v520, %v516
      %v569 = vpack.c.b16 %v521, %v517
      %v570 = vpack.c.b16 %v522, %v518
      %v571 = vpack.c.b16 %v527, %v523
      %v572 = vpack.c.b16 %v528, %v524
      %v573 = vpack.c.b16 %v529, %v525
      %v574 = vpack.c.b16 %v530, %v526
      %v575 = vpack.c.b16 %v535, %v531
      %v576 = vpack.c.b16 %v536, %v532
      %v577 = vpack.c.b16 %v537, %v533
      %v578 = vpack.c.b16 %v538, %v534
      %v579 = vpack.c.b16 %v543, %v539
      %v580 = vpack.c.b16 %v544, %v540
      %v581 = vpack.c.b16 %v545, %v541
      %v582 = vpack.c.b16 %v546, %v542
      %v583 = vpack.c.b16 %v551, %v547
      %v584 = vpack.c.b16 %v552, %v548
      %v585 = vpack.c.b16 %v553, %v549
      %v586 = vpack.c.b16 %v554, %v550
      %619 = vmatpush.bf16.msra.mxu0 %v583
      %620 = vmatpush.bf16.msra.mxu0 %v579
      %621 = vmatpush.bf16.msra.mxu0 %v575
      %622 = vmatpush.bf16.msra.mxu0 %v571
      %623 = vmatpush.bf16.msra.mxu0 %v567
      %624 = vmatpush.bf16.msra.mxu0 %v563
      %625 = vmatpush.bf16.msra.mxu0 %v559
      %626 = vmatpush.bf16.msra.mxu0 %v555
      %627 = vmatmul.bf16.gmra.mxu0 %v426
      %v628 = vpop.f32.mrf.mxu0
      %v629 = vadd.f32 0.0, %v628
      %v630 = vpop.f32.mrf.mxu0
      %631 = vdwg.mxu0
      %632 = vmatpush.bf16.msra.mxu0 %v584
      %633 = vmatpush.bf16.msra.mxu0 %v580
      %634 = vmatpush.bf16.msra.mxu0 %v576
      %635 = vmatpush.bf16.msra.mxu0 %v572
      %636 = vmatpush.bf16.msra.mxu0 %v568
      %637 = vmatpush.bf16.msra.mxu0 %v564
      %638 = vmatpush.bf16.msra.mxu0 %v560
      %639 = vmatpush.bf16.msra.mxu0 %v556
      %640 = vmatmul.bf16.gmra.mxu0 %v426
      %v641 = vpop.f32.mrf.mxu0
      %v642 = vadd.f32 0.0, %v641
      %v643 = vpop.f32.mrf.mxu0
      %644 = vdwg.mxu0
      %645 = vmatpush.bf16.msra.mxu0 %v585
      %646 = vmatpush.bf16.msra.mxu0 %v581
      %647 = vmatpush.bf16.msra.mxu0 %v577
      %648 = vmatpush.bf16.msra.mxu0 %v573
      %649 = vmatpush.bf16.msra.mxu0 %v569
      %650 = vmatpush.bf16.msra.mxu0 %v565
      %651 = vmatpush.bf16.msra.mxu0 %v561
      %652 = vmatpush.bf16.msra.mxu0 %v557
      %653 = vmatmul.bf16.gmra.mxu0 %v426
      %v654 = vpop.f32.mrf.mxu0
      %v655 = vadd.f32 0.0, %v654
      %v656 = vpop.f32.mrf.mxu0
      %657 = vdwg.mxu0
      %658 = vmatpush.bf16.msra.mxu0 %v586
      %659 = vmatpush.bf16.msra.mxu0 %v582
      %660 = vmatpush.bf16.msra.mxu0 %v578
      %661 = vmatpush.bf16.msra.mxu0 %v574
      %662 = vmatpush.bf16.msra.mxu0 %v570
      %663 = vmatpush.bf16.msra.mxu0 %v566
      %664 = vmatpush.bf16.msra.mxu0 %v562
      %665 = vmatpush.bf16.msra.mxu0 %v558
      %666 = vmatmul.bf16.gmra.mxu0 %v426
      %v667 = vpop.f32.mrf.mxu0
      %v668 = vadd.f32 0.0, %v667
      %v669 = vpop.f32.mrf.mxu0
      %670 = vdwg.mxu0
      %v671 = vadd.f32 %v422, %v629
      %v672 = vadd.f32 %v423, %v642
      %v673 = vadd.f32 %v424, %v655
      %v674 = vadd.f32 %v425, %v668
      %v675 = vxor.u32 %v671, 2147483648
      %v676 = vmul.f32 %v675, 1.442695
      %v677 = vpow.pop %v676
      %v678 = vadd.f32 %v677, 1.0
      %v679 = vrcp.pop %v678
      %v680 = vmul.f32 %v678, %v679
      %v681 = vsub.f32 1.0, %v680
      %v682 = vmul.f32 %v679, %v681
      %v683 = vadd.f32 %v679, %v682
      %vm684 = vweird.f32 %v678
      %vm685 = vweird.f32 %v679
      %vm686 = vmor %vm684, %vm685
      %v687 = vsel %vm686, %v679, %v683
      %v688 = vand.u32 2147483647, %v678
      %vm689 = vcmp.eq.f32.partialorder %v688, 8.507059e+37
      %v690 = vand.u32 %v678, 2147483648
      %v691 = vor.u32 1.1754944e-38, %v690
      %v692 = vsel %vm689, %v691, %v687
      %v693 = vmul.f32 1.0, %v692
      %v694 = vxor.u32 %v672, 2147483648
      %v695 = vmul.f32 %v694, 1.442695
      %v696 = vpow.pop %v695
      %v697 = vadd.f32 %v696, 1.0
      %v698 = vrcp.pop %v697
      %v699 = vmul.f32 %v697, %v698
      %v700 = vsub.f32 1.0, %v699
      %v701 = vmul.f32 %v698, %v700
      %v702 = vadd.f32 %v698, %v701
      %vm703 = vweird.f32 %v697
      %vm704 = vweird.f32 %v698
      %vm705 = vmor %vm703, %vm704
      %v706 = vsel %vm705, %v698, %v702
      %v707 = vand.u32 2147483647, %v697
      %vm708 = vcmp.eq.f32.partialorder %v707, 8.507059e+37
      %v709 = vand.u32 %v697, 2147483648
      %v710 = vor.u32 1.1754944e-38, %v709
      %v711 = vsel %vm708, %v710, %v706
      %v712 = vmul.f32 1.0, %v711
      %v713 = vtanh.pop %v673
      %v714 = vxor.u32 %v674, 2147483648
      %v715 = vmul.f32 %v714, 1.442695
      %v716 = vpow.pop %v715
      %v717 = vadd.f32 %v716, 1.0
      %v718 = vrcp.pop %v717
      %v719 = vmul.f32 %v717, %v718
      %v720 = vsub.f32 1.0, %v719
      %v721 = vmul.f32 %v718, %v720
      %v722 = vadd.f32 %v718, %v721
      %vm723 = vweird.f32 %v717
      %vm724 = vweird.f32 %v718
      %vm725 = vmor %vm723, %vm724
      %v726 = vsel %vm725, %v718, %v722
      %v727 = vand.u32 2147483647, %v717
      %vm728 = vcmp.eq.f32.partialorder %v727, 8.507059e+37
      %v729 = vand.u32 %v717, 2147483648
      %v730 = vor.u32 1.1754944e-38, %v729
      %v731 = vsel %vm728, %v730, %v726
      %v732 = vmul.f32 1.0, %v731
      %v733 = vmul.f32 %v712, %v418
      %v734 = vmul.f32 %v693, %v713
      %v735 = vadd.f32 %v733, %v734
      %v736 = vtanh.pop %v735
      %v737 = vmul.f32 %v732, %v736
      %s738 = smul.u32 1, 4
      %s739 = smul.addr %s738, 8
      %s740 = scalar_lea.vmem [#allocation2], %s739
      %v741 = vld [vmem:[%s740] sm:$0xff]
      %v742 = vld [vmem:[%s740 + $0x8] sm:$0xff]
      %v743 = vld [vmem:[%s740 + $0x10] sm:$0xff]
      %v744 = vld [vmem:[%s740 + $0x18] sm:$0xff]
      %v745 = vpack.c.bf16 %v737, %v737
      %746 = vmatpush.bf16.msra.mxu0 %v583
      %747 = vmatpush.bf16.msra.mxu0 %v579
      %748 = vmatpush.bf16.msra.mxu0 %v575
      %749 = vmatpush.bf16.msra.mxu0 %v571
      %750 = vmatpush.bf16.msra.mxu0 %v567
      %751 = vmatpush.bf16.msra.mxu0 %v563
      %752 = vmatpush.bf16.msra.mxu0 %v559
      %753 = vmatpush.bf16.msra.mxu0 %v555
      %754 = vmatmul.bf16.gmra.mxu0 %v745
      %v755 = vpop.f32.mrf.mxu0
      %v756 = vadd.f32 0.0, %v755
      %v757 = vpop.f32.mrf.mxu0
      %758 = vdwg.mxu0
      %759 = vmatpush.bf16.msra.mxu0 %v584
      %760 = vmatpush.bf16.msra.mxu0 %v580
      %761 = vmatpush.bf16.msra.mxu0 %v576
      %762 = vmatpush.bf16.msra.mxu0 %v572
      %763 = vmatpush.bf16.msra.mxu0 %v568
      %764 = vmatpush.bf16.msra.mxu0 %v564
      %765 = vmatpush.bf16.msra.mxu0 %v560
      %766 = vmatpush.bf16.msra.mxu0 %v556
      %767 = vmatmul.bf16.gmra.mxu0 %v745
      %v768 = vpop.f32.mrf.mxu0
      %v769 = vadd.f32 0.0, %v768
      %v770 = vpop.f32.mrf.mxu0
      %771 = vdwg.mxu0
      %772 = vmatpush.bf16.msra.mxu0 %v585
      %773 = vmatpush.bf16.msra.mxu0 %v581
      %774 = vmatpush.bf16.msra.mxu0 %v577
      %775 = vmatpush.bf16.msra.mxu0 %v573
      %776 = vmatpush.bf16.msra.mxu0 %v569
      %777 = vmatpush.bf16.msra.mxu0 %v565
      %778 = vmatpush.bf16.msra.mxu0 %v561
      %779 = vmatpush.bf16.msra.mxu0 %v557
      %780 = vmatmul.bf16.gmra.mxu0 %v745
      %v781 = vpop.f32.mrf.mxu0
      %v782 = vadd.f32 0.0, %v781
      %v783 = vpop.f32.mrf.mxu0
      %784 = vdwg.mxu0
      %785 = vmatpush.bf16.msra.mxu0 %v586
      %786 = vmatpush.bf16.msra.mxu0 %v582
      %787 = vmatpush.bf16.msra.mxu0 %v578
      %788 = vmatpush.bf16.msra.mxu0 %v574
      %789 = vmatpush.bf16.msra.mxu0 %v570
      %790 = vmatpush.bf16.msra.mxu0 %v566
      %791 = vmatpush.bf16.msra.mxu0 %v562
      %792 = vmatpush.bf16.msra.mxu0 %v558
      %793 = vmatmul.bf16.gmra.mxu0 %v745
      %v794 = vpop.f32.mrf.mxu0
      %v795 = vadd.f32 0.0, %v794
      %v796 = vpop.f32.mrf.mxu0
      %797 = vdwg.mxu0
      %v798 = vadd.f32 %v741, %v756
      %v799 = vadd.f32 %v742, %v769
      %v800 = vadd.f32 %v743, %v782
      %v801 = vadd.f32 %v744, %v795
      %v802 = vxor.u32 %v798, 2147483648
      %v803 = vmul.f32 %v802, 1.442695
      %v804 = vpow.pop %v803
      %v805 = vadd.f32 %v804, 1.0
      %v806 = vrcp.pop %v805
      %v807 = vmul.f32 %v805, %v806
      %v808 = vsub.f32 1.0, %v807
      %v809 = vmul.f32 %v806, %v808
      %v810 = vadd.f32 %v806, %v809
      %vm811 = vweird.f32 %v805
      %vm812 = vweird.f32 %v806
      %vm813 = vmor %vm811, %vm812
      %v814 = vsel %vm813, %v806, %v810
      %v815 = vand.u32 2147483647, %v805
      %vm816 = vcmp.eq.f32.partialorder %v815, 8.507059e+37
      %v817 = vand.u32 %v805, 2147483648
      %v818 = vor.u32 1.1754944e-38, %v817
      %v819 = vsel %vm816, %v818, %v814
      %v820 = vmul.f32 1.0, %v819
      %v821 = vxor.u32 %v799, 2147483648
      %v822 = vmul.f32 %v821, 1.442695
      %v823 = vpow.pop %v822
      %v824 = vadd.f32 %v823, 1.0
      %v825 = vrcp.pop %v824
      %v826 = vmul.f32 %v824, %v825
      %v827 = vsub.f32 1.0, %v826
      %v828 = vmul.f32 %v825, %v827
      %v829 = vadd.f32 %v825, %v828
      %vm830 = vweird.f32 %v824
      %vm831 = vweird.f32 %v825
      %vm832 = vmor %vm830, %vm831
      %v833 = vsel %vm832, %v825, %v829
      %v834 = vand.u32 2147483647, %v824
      %vm835 = vcmp.eq.f32.partialorder %v834, 8.507059e+37
      %v836 = vand.u32 %v824, 2147483648
      %v837 = vor.u32 1.1754944e-38, %v836
      %v838 = vsel %vm835, %v837, %v833
      %v839 = vmul.f32 1.0, %v838
      %v840 = vtanh.pop %v800
      %v841 = vxor.u32 %v801, 2147483648
      %v842 = vmul.f32 %v841, 1.442695
      %v843 = vpow.pop %v842
      %v844 = vadd.f32 %v843, 1.0
      %v845 = vrcp.pop %v844
      %v846 = vmul.f32 %v844, %v845
      %v847 = vsub.f32 1.0, %v846
      %v848 = vmul.f32 %v845, %v847
      %v849 = vadd.f32 %v845, %v848
      %vm850 = vweird.f32 %v844
      %vm851 = vweird.f32 %v845
      %vm852 = vmor %vm850, %vm851
      %v853 = vsel %vm852, %v845, %v849
      %v854 = vand.u32 2147483647, %v844
      %vm855 = vcmp.eq.f32.partialorder %v854, 8.507059e+37
      %v856 = vand.u32 %v844, 2147483648
      %v857 = vor.u32 1.1754944e-38, %v856
      %v858 = vsel %vm855, %v857, %v853
      %v859 = vmul.f32 1.0, %v858
      %v860 = vmul.f32 %v839, %v735
      %v861 = vmul.f32 %v820, %v840
      %v862 = vadd.f32 %v860, %v861
      %v863 = vtanh.pop %v862
      %v864 = vmul.f32 %v859, %v863
      %s865 = smul.u32 2, 4
      %s866 = smul.addr %s865, 8
      %s867 = scalar_lea.vmem [#allocation2], %s866
      %v868 = vld [vmem:[%s867] sm:$0xff]
      %v869 = vld [vmem:[%s867 + $0x8] sm:$0xff]
      %v870 = vld [vmem:[%s867 + $0x10] sm:$0xff]
      %v871 = vld [vmem:[%s867 + $0x18] sm:$0xff]
      %v872 = vpack.c.bf16 %v864, %v864
      %873 = vmatpush.bf16.msra.mxu0 %v583
      %874 = vmatpush.bf16.msra.mxu0 %v579
      %875 = vmatpush.bf16.msra.mxu0 %v575
      %876 = vmatpush.bf16.msra.mxu0 %v571
      %877 = vmatpush.bf16.msra.mxu0 %v567
      %878 = vmatpush.bf16.msra.mxu0 %v563
      %879 = vmatpush.bf16.msra.mxu0 %v559
      %880 = vmatpush.bf16.msra.mxu0 %v555
      %881 = vmatmul.bf16.gmra.mxu0 %v872
      %v882 = vpop.f32.mrf.mxu0
      %v883 = vadd.f32 0.0, %v882
      %v884 = vpop.f32.mrf.mxu0
      %885 = vdwg.mxu0
      %886 = vmatpush.bf16.msra.mxu0 %v584
      %887 = vmatpush.bf16.msra.mxu0 %v580
      %888 = vmatpush.bf16.msra.mxu0 %v576
      %889 = vmatpush.bf16.msra.mxu0 %v572
      %890 = vmatpush.bf16.msra.mxu0 %v568
      %891 = vmatpush.bf16.msra.mxu0 %v564
      %892 = vmatpush.bf16.msra.mxu0 %v560
      %893 = vmatpush.bf16.msra.mxu0 %v556
      %894 = vmatmul.bf16.gmra.mxu0 %v872
      %v895 = vpop.f32.mrf.mxu0
      %v896 = vadd.f32 0.0, %v895
      %v897 = vpop.f32.mrf.mxu0
      %898 = vdwg.mxu0
      %899 = vmatpush.bf16.msra.mxu0 %v585
      %900 = vmatpush.bf16.msra.mxu0 %v581
      %901 = vmatpush.bf16.msra.mxu0 %v577
      %902 = vmatpush.bf16.msra.mxu0 %v573
      %903 = vmatpush.bf16.msra.mxu0 %v569
      %904 = vmatpush.bf16.msra.mxu0 %v565
      %905 = vmatpush.bf16.msra.mxu0 %v561
      %906 = vmatpush.bf16.msra.mxu0 %v557
      %907 = vmatmul.bf16.gmra.mxu0 %v872
      %v908 = vpop.f32.mrf.mxu0
      %v909 = vadd.f32 0.0, %v908
      %v910 = vpop.f32.mrf.mxu0
      %911 = vdwg.mxu0
      %912 = vmatpush.bf16.msra.mxu0 %v586
      %913 = vmatpush.bf16.msra.mxu0 %v582
      %914 = vmatpush.bf16.msra.mxu0 %v578
      %915 = vmatpush.bf16.msra.mxu0 %v574
      %916 = vmatpush.bf16.msra.mxu0 %v570
      %917 = vmatpush.bf16.msra.mxu0 %v566
      %918 = vmatpush.bf16.msra.mxu0 %v562
      %919 = vmatpush.bf16.msra.mxu0 %v558
      %920 = vmatmul.bf16.gmra.mxu0 %v872
      %v921 = vpop.f32.mrf.mxu0
      %v922 = vadd.f32 0.0, %v921
      %v923 = vpop.f32.mrf.mxu0
      %924 = vdwg.mxu0
      %v925 = vadd.f32 %v868, %v883
      %v926 = vadd.f32 %v869, %v896
      %v927 = vadd.f32 %v870, %v909
      %v928 = vadd.f32 %v871, %v922
      %v929 = vxor.u32 %v925, 2147483648
      %v930 = vmul.f32 %v929, 1.442695
      %v931 = vpow.pop %v930
      %v932 = vadd.f32 %v931, 1.0
      %v933 = vrcp.pop %v932
      %v934 = vmul.f32 %v932, %v933
      %v935 = vsub.f32 1.0, %v934
      %v936 = vmul.f32 %v933, %v935
      %v937 = vadd.f32 %v933, %v936
      %vm938 = vweird.f32 %v932
      %vm939 = vweird.f32 %v933
      %vm940 = vmor %vm938, %vm939
      %v941 = vsel %vm940, %v933, %v937
      %v942 = vand.u32 2147483647, %v932
      %vm943 = vcmp.eq.f32.partialorder %v942, 8.507059e+37
      %v944 = vand.u32 %v932, 2147483648
      %v945 = vor.u32 1.1754944e-38, %v944
      %v946 = vsel %vm943, %v945, %v941
      %v947 = vmul.f32 1.0, %v946
      %v948 = vxor.u32 %v926, 2147483648
      %v949 = vmul.f32 %v948, 1.442695
      %v950 = vpow.pop %v949
      %v951 = vadd.f32 %v950, 1.0
      %v952 = vrcp.pop %v951
      %v953 = vmul.f32 %v951, %v952
      %v954 = vsub.f32 1.0, %v953
      %v955 = vmul.f32 %v952, %v954
      %v956 = vadd.f32 %v952, %v955
      %vm957 = vweird.f32 %v951
      %vm958 = vweird.f32 %v952
      %vm959 = vmor %vm957, %vm958
      %v960 = vsel %vm959, %v952, %v956
      %v961 = vand.u32 2147483647, %v951
      %vm962 = vcmp.eq.f32.partialorder %v961, 8.507059e+37
      %v963 = vand.u32 %v951, 2147483648
      %v964 = vor.u32 1.1754944e-38, %v963
      %v965 = vsel %vm962, %v964, %v960
      %v966 = vmul.f32 1.0, %v965
      %v967 = vtanh.pop %v927
      %v968 = vxor.u32 %v928, 2147483648
      %v969 = vmul.f32 %v968, 1.442695
      %v970 = vpow.pop %v969
      %v971 = vadd.f32 %v970, 1.0
      %v972 = vrcp.pop %v971
      %v973 = vmul.f32 %v971, %v972
      %v974 = vsub.f32 1.0, %v973
      %v975 = vmul.f32 %v972, %v974
      %v976 = vadd.f32 %v972, %v975
      %vm977 = vweird.f32 %v971
      %vm978 = vweird.f32 %v972
      %vm979 = vmor %vm977, %vm978
      %v980 = vsel %vm979, %v972, %v976
      %v981 = vand.u32 2147483647, %v971
      %vm982 = vcmp.eq.f32.partialorder %v981, 8.507059e+37
      %v983 = vand.u32 %v971, 2147483648
      %v984 = vor.u32 1.1754944e-38, %v983
      %v985 = vsel %vm982, %v984, %v980
      %v986 = vmul.f32 1.0, %v985
      %v987 = vmul.f32 %v966, %v862
      %v988 = vmul.f32 %v947, %v967
      %v989 = vadd.f32 %v987, %v988
      %v990 = vtanh.pop %v989
      %v991 = vmul.f32 %v986, %v990
      %s992 = smul.u32 3, 4
      %s993 = smul.addr %s992, 8
      %s994 = scalar_lea.vmem [#allocation2], %s993
      %v995 = vld [vmem:[%s994] sm:$0xff]
      %v996 = vld [vmem:[%s994 + $0x8] sm:$0xff]
      %v997 = vld [vmem:[%s994 + $0x10] sm:$0xff]
      %v998 = vld [vmem:[%s994 + $0x18] sm:$0xff]
      %v999 = vpack.c.bf16 %v991, %v991
      %1000 = vmatpush.bf16.msra.mxu0 %v583
      %1001 = vmatpush.bf16.msra.mxu0 %v579
      %1002 = vmatpush.bf16.msra.mxu0 %v575
      %1003 = vmatpush.bf16.msra.mxu0 %v571
      %1004 = vmatpush.bf16.msra.mxu0 %v567
      %1005 = vmatpush.bf16.msra.mxu0 %v563
      %1006 = vmatpush.bf16.msra.mxu0 %v559
      %1007 = vmatpush.bf16.msra.mxu0 %v555
      %1008 = vmatmul.bf16.gmra.mxu0 %v999
      %v1009 = vpop.f32.mrf.mxu0
      %v1010 = vadd.f32 0.0, %v1009
      %v1011 = vpop.f32.mrf.mxu0
      %1012 = vdwg.mxu0
      %1013 = vmatpush.bf16.msra.mxu0 %v584
      %1014 = vmatpush.bf16.msra.mxu0 %v580
      %1015 = vmatpush.bf16.msra.mxu0 %v576
      %1016 = vmatpush.bf16.msra.mxu0 %v572
      %1017 = vmatpush.bf16.msra.mxu0 %v568
      %1018 = vmatpush.bf16.msra.mxu0 %v564
      %1019 = vmatpush.bf16.msra.mxu0 %v560
      %1020 = vmatpush.bf16.msra.mxu0 %v556
      %1021 = vmatmul.bf16.gmra.mxu0 %v999
      %v1022 = vpop.f32.mrf.mxu0
      %v1023 = vadd.f32 0.0, %v1022
      %v1024 = vpop.f32.mrf.mxu0
      %1025 = vdwg.mxu0
      %1026 = vmatpush.bf16.msra.mxu0 %v585
      %1027 = vmatpush.bf16.msra.mxu0 %v581
      %1028 = vmatpush.bf16.msra.mxu0 %v577
      %1029 = vmatpush.bf16.msra.mxu0 %v573
      %1030 = vmatpush.bf16.msra.mxu0 %v569
      %1031 = vmatpush.bf16.msra.mxu0 %v565
      %1032 = vmatpush.bf16.msra.mxu0 %v561
      %1033 = vmatpush.bf16.msra.mxu0 %v557
      %1034 = vmatmul.bf16.gmra.mxu0 %v999
      %v1035 = vpop.f32.mrf.mxu0
      %v1036 = vadd.f32 0.0, %v1035
      %v1037 = vpop.f32.mrf.mxu0
      %1038 = vdwg.mxu0
      %1039 = vmatpush.bf16.msra.mxu0 %v586
      %1040 = vmatpush.bf16.msra.mxu0 %v582
      %1041 = vmatpush.bf16.msra.mxu0 %v578
      %1042 = vmatpush.bf16.msra.mxu0 %v574
      %1043 = vmatpush.bf16.msra.mxu0 %v570
      %1044 = vmatpush.bf16.msra.mxu0 %v566
      %1045 = vmatpush.bf16.msra.mxu0 %v562
      %1046 = vmatpush.bf16.msra.mxu0 %v558
      %1047 = vmatmul.bf16.gmra.mxu0 %v999
      %v1048 = vpop.f32.mrf.mxu0
      %v1049 = vadd.f32 0.0, %v1048
      %v1050 = vpop.f32.mrf.mxu0
      %1051 = vdwg.mxu0
      %v1052 = vadd.f32 %v995, %v1010
      %v1053 = vadd.f32 %v996, %v1023
      %v1054 = vadd.f32 %v997, %v1036
      %v1055 = vadd.f32 %v998, %v1049
      %v1056 = vxor.u32 %v1052, 2147483648
      %v1057 = vmul.f32 %v1056, 1.442695
      %v1058 = vpow.pop %v1057
      %v1059 = vadd.f32 %v1058, 1.0
      %v1060 = vrcp.pop %v1059
      %v1061 = vmul.f32 %v1059, %v1060
      %v1062 = vsub.f32 1.0, %v1061
      %v1063 = vmul.f32 %v1060, %v1062
      %v1064 = vadd.f32 %v1060, %v1063
      %vm1065 = vweird.f32 %v1059
      %vm1066 = vweird.f32 %v1060
      %vm1067 = vmor %vm1065, %vm1066
      %v1068 = vsel %vm1067, %v1060, %v1064
      %v1069 = vand.u32 2147483647, %v1059
      %vm1070 = vcmp.eq.f32.partialorder %v1069, 8.507059e+37
      %v1071 = vand.u32 %v1059, 2147483648
      %v1072 = vor.u32 1.1754944e-38, %v1071
      %v1073 = vsel %vm1070, %v1072, %v1068
      %v1074 = vmul.f32 1.0, %v1073
      %v1075 = vxor.u32 %v1053, 2147483648
      %v1076 = vmul.f32 %v1075, 1.442695
      %v1077 = vpow.pop %v1076
      %v1078 = vadd.f32 %v1077, 1.0
      %v1079 = vrcp.pop %v1078
      %v1080 = vmul.f32 %v1078, %v1079
      %v1081 = vsub.f32 1.0, %v1080
      %v1082 = vmul.f32 %v1079, %v1081
      %v1083 = vadd.f32 %v1079, %v1082
      %vm1084 = vweird.f32 %v1078
      %vm1085 = vweird.f32 %v1079
      %vm1086 = vmor %vm1084, %vm1085
      %v1087 = vsel %vm1086, %v1079, %v1083
      %v1088 = vand.u32 2147483647, %v1078
      %vm1089 = vcmp.eq.f32.partialorder %v1088, 8.507059e+37
      %v1090 = vand.u32 %v1078, 2147483648
      %v1091 = vor.u32 1.1754944e-38, %v1090
      %v1092 = vsel %vm1089, %v1091, %v1087
      %v1093 = vmul.f32 1.0, %v1092
      %v1094 = vtanh.pop %v1054
      %v1095 = vxor.u32 %v1055, 2147483648
      %v1096 = vmul.f32 %v1095, 1.442695
      %v1097 = vpow.pop %v1096
      %v1098 = vadd.f32 %v1097, 1.0
      %v1099 = vrcp.pop %v1098
      %v1100 = vmul.f32 %v1098, %v1099
      %v1101 = vsub.f32 1.0, %v1100
      %v1102 = vmul.f32 %v1099, %v1101
      %v1103 = vadd.f32 %v1099, %v1102
      %vm1104 = vweird.f32 %v1098
      %vm1105 = vweird.f32 %v1099
      %vm1106 = vmor %vm1104, %vm1105
      %v1107 = vsel %vm1106, %v1099, %v1103
      %v1108 = vand.u32 2147483647, %v1098
      %vm1109 = vcmp.eq.f32.partialorder %v1108, 8.507059e+37
      %v1110 = vand.u32 %v1098, 2147483648
      %v1111 = vor.u32 1.1754944e-38, %v1110
      %v1112 = vsel %vm1109, %v1111, %v1107
      %v1113 = vmul.f32 1.0, %v1112
      %v1114 = vmul.f32 %v1093, %v989
      %v1115 = vmul.f32 %v1074, %v1094
      %v1116 = vadd.f32 %v1114, %v1115
      %v1117 = vtanh.pop %v1116
      %v1118 = vmul.f32 %v1113, %v1117
      %1119 = vst [vmem:[#allocation3] sm:$0xff] %v1118
      %1120 = vst [vmem:[#allocation4] sm:$0xff] %v1116
      %p1121 = scmp.eq.s32.totalorder %s17, 1
      // Predicated region
      $region49: #{nlpnet_forward.1} parent=43 // pred_check
        %p1122 = pneg %p1121
      $region50: #{nlpnet_forward.1} parent=43 // pred_check_branch
        %1124 = sbr.rel (%p1122) target = $region52
      $region51: #{nlpnet_forward.1} parent=43 // pred_region
        %v1125 = vpack.c.bf16 %v1118, %v1118
        %v1126 = vld [vmem:[%s4] sm:$0xf]
        %v1127 = vld [vmem:[%s4 + $0x4] sm:$0xf]
        %v1128 = vld [vmem:[%s4 + $0x8] sm:$0xf]
        %v1129 = vld [vmem:[%s4 + $0xc] sm:$0xf]
        %v1130 = vld [vmem:[%s4 + $0x10] sm:$0xf]
        %v1131 = vld [vmem:[%s4 + $0x14] sm:$0xf]
        %v1132 = vld [vmem:[%s4 + $0x18] sm:$0xf]
        %v1133 = vld [vmem:[%s4 + $0x1c] sm:$0xf]
        %v1134 = vld [vmem:[%s4 + $0x20] sm:$0xf]
        %v1135 = vld [vmem:[%s4 + $0x24] sm:$0xf]
        %v1136 = vld [vmem:[%s4 + $0x28] sm:$0xf]
        %v1137 = vld [vmem:[%s4 + $0x2c] sm:$0xf]
        %v1138 = vld [vmem:[%s4 + $0x30] sm:$0xf]
        %v1139 = vld [vmem:[%s4 + $0x34] sm:$0xf]
        %v1140 = vld [vmem:[%s4 + $0x38] sm:$0xf]
        %v1141 = vld [vmem:[%s4 + $0x3c] sm:$0xf]
        %v1142 = vld [vmem:[%s5] sm:$0x1]
        %v1144 = vperm.slane %v1142, 0
        %v1162 = vunpack.c.l.b16 %v1126
        %v1163 = vunpack.c.l.b16 %v1127
        %v1164 = vunpack.c.l.b16 %v1128
        %v1165 = vunpack.c.l.b16 %v1129
        %v1166 = vunpack.c.l.b16 %v1130
        %v1167 = vunpack.c.l.b16 %v1131
        %v1168 = vunpack.c.l.b16 %v1132
        %v1169 = vunpack.c.l.b16 %v1133
        %v1170 = vunpack.c.l.b16 %v1134
        %v1171 = vunpack.c.l.b16 %v1135
        %v1172 = vunpack.c.l.b16 %v1136
        %v1173 = vunpack.c.l.b16 %v1137
        %v1174 = vunpack.c.l.b16 %v1138
        %v1175 = vunpack.c.l.b16 %v1139
        %v1176 = vunpack.c.l.b16 %v1140
        %v1177 = vunpack.c.l.b16 %v1141
        %v1178 = vpack.c.b16 %v1163, %v1162
        %v1179 = vpack.c.b16 %v1165, %v1164
        %v1180 = vpack.c.b16 %v1167, %v1166
        %v1181 = vpack.c.b16 %v1169, %v1168
        %v1182 = vpack.c.b16 %v1171, %v1170
        %v1183 = vpack.c.b16 %v1173, %v1172
        %v1184 = vpack.c.b16 %v1175, %v1174
        %v1185 = vpack.c.b16 %v1177, %v1176
        %1194 = vmatpush.bf16.msra.mxu0 %v1185
        %1195 = vmatpush.bf16.msra.mxu0 %v1184
        %1196 = vmatpush.bf16.msra.mxu0 %v1183
        %1197 = vmatpush.bf16.msra.mxu0 %v1182
        %1198 = vmatpush.bf16.msra.mxu0 %v1181
        %1199 = vmatpush.bf16.msra.mxu0 %v1180
        %1200 = vmatpush.bf16.msra.mxu0 %v1179
        %1201 = vmatpush.bf16.msra.mxu0 %v1178
        %1202 = vmatmul.bf16.gmra.mxu0 %v1125
        %v1203 = vpop.f32.mrf.mxu0
        %v1204 = vadd.f32 %v1144, %v1203
        %v1205 = vpop.f32.mrf.mxu0
        %1206 = vdwg.mxu0
        %v1207 = vxor.u32 %v1204, 2147483648
        %v1208 = vmul.f32 %v1207, 1.442695
        %v1209 = vpow.pop %v1208
        %v1210 = vadd.f32 %v1209, 1.0
        %v1211 = vrcp.pop %v1210
        %v1212 = vmul.f32 %v1210, %v1211
        %v1213 = vsub.f32 1.0, %v1212
        %v1214 = vmul.f32 %v1211, %v1213
        %v1215 = vadd.f32 %v1211, %v1214
        %vm1216 = vweird.f32 %v1210
        %vm1217 = vweird.f32 %v1211
        %vm1218 = vmor %vm1216, %vm1217
        %v1219 = vsel %vm1218, %v1211, %v1215
        %v1220 = vand.u32 2147483647, %v1210
        %vm1221 = vcmp.eq.f32.partialorder %v1220, 8.507059e+37
        %v1222 = vand.u32 %v1210, 2147483648
        %v1223 = vor.u32 1.1754944e-38, %v1222
        %v1224 = vsel %vm1221, %v1223, %v1219
        %v1225 = vmul.f32 1.0, %v1224
        %1226 = vst [vmem:[%s6] sm:$0xff] %v1225
      $region52: #{nlpnet_forward.1} parent=43 // pred_fallthru
        _
      // Predicated region
      $region53: #{nlpnet_forward.1} parent=43 // pred_check
        %p1227 = pneg %p161
      $region54: #{nlpnet_forward.1} parent=43 // pred_check_branch
        %1229 = sbr.rel (%p1227) target = $region56
      $region55: #{nlpnet_forward.1} parent=43 // pred_region
        _
      $region56: #{nlpnet_forward.1} parent=43 // pred_fallthru
        _
      // Predicated region
      $region57: #{nlpnet_forward.1} parent=43 // pred_check
        %p1230 = pneg %p161
      $region58: #{nlpnet_forward.1} parent=43 // pred_check_branch
        %1232 = sbr.rel (%p1230) target = $region60
      $region59: #{nlpnet_forward.1} parent=43 // pred_region
        _
      $region60: #{nlpnet_forward.1} parent=43 // pred_fallthru
        _
    $region44: #{nlpnet_forward.1} parent=5 // pred_fallthru
      _
    %p1233 = scmp.le.s32.totalorder 2, %s12
    // Predicated region
    $region61: #{nlpnet_forward.1} parent=5 // pred_check
      %p1234 = pneg %p1233
    $region62: #{nlpnet_forward.1} parent=5 // pred_check_branch
      %1236 = sbr.rel (%p1234) target = $region64
    $region63: #{nlpnet_forward.1} parent=5 // pred_region
      %s1237 = ssub.s32 %s12, 2
    $region64: #{nlpnet_forward.1} parent=5 // pred_fallthru
      _
  $region6: #{nlpnet_forward.1} parent=0 // loop_footer
    %s16 = sadd.s32 1, %s12
  $region7: #{nlpnet_forward.1} parent=0 // loop_footer_branch
    %11 = sbr.rel target = $region3
  $region8: #{nlpnet_forward.1} parent=0 // loop_exit
    _

</llo_original>
